<compile_context>
chip_gen: v7x
topology: tpu7x:2x2x1
jax: 0.10.0
libtpu: 0.0.40
codegen_flags: <defaults>
</compile_context>

<pallas_src>
import jax
import jax.numpy as jnp
from jax.experimental import pallas as pl
from jax.experimental.pallas import tpu as pltpu

INPUT_SIZE = 35
HIDDEN_SIZE = 300
NUM_CLASSES = 16
HPAD = 384          # hidden padded to 3 * 128 lanes
OPAD = 128          # output padded to one full lane tile
BN_EPS = 1e-5


def _bn_relu(y, gamma, beta, inv_b):
    """Training-mode BatchNorm1d + ReLU, one-pass stats, all f32."""
    s1 = jnp.sum(y, axis=0, keepdims=True)           # [1, HPAD]
    s2 = jnp.sum(y * y, axis=0, keepdims=True)       # [1, HPAD]
    mu = s1 * inv_b
    var = s2 * inv_b - mu * mu                        # biased variance
    y_hat = (y - mu) * jax.lax.rsqrt(var + BN_EPS)
    return jnp.maximum(y_hat * gamma + beta, 0.0)


def ffnet_kernel(x_ref, w1_ref, w2_ref, w3_ref, w4_ref, p_ref, o_ref):
    inv_b = 1.0 / x_ref.shape[0]

    # Packed small params: rows 0..2 = gamma1..3, rows 3..5 = beta1..3, row 6 = b4.
    g1, g2, g3 = p_ref[0:1, :], p_ref[1:2, :], p_ref[2:3, :]
    be1, be2, be3 = p_ref[3:4, :], p_ref[4:5, :], p_ref[5:6, :]
    b4 = p_ref[6:7, :OPAD]

    h = x_ref[...]                                                    # [B, 35] f32

    # Linear biases b1..b3 are omitted: exactly cancelled by BN mean subtraction.
    y = jnp.dot(h.astype(jnp.bfloat16), w1_ref[...],
                preferred_element_type=jnp.float32)                   # [B, HPAD]
    h = _bn_relu(y, g1, be1, inv_b)

    y = jnp.dot(h.astype(jnp.bfloat16), w2_ref[...],
                preferred_element_type=jnp.float32)
    h = _bn_relu(y, g2, be2, inv_b)

    y = jnp.dot(h.astype(jnp.bfloat16), w3_ref[...],
                preferred_element_type=jnp.float32)
    h = _bn_relu(y, g3, be3, inv_b)

    out = jnp.dot(h.astype(jnp.bfloat16), w4_ref[...],
                  preferred_element_type=jnp.float32) + b4            # [B, OPAD]
    o_ref[...] = out


def _full_spec(shape):
    # Block == full array (allowed even when dims are not (8,128) multiples).
    return pl.BlockSpec(shape, lambda: tuple(0 for _ in shape))


def ffnet_forward(x, w1, w2, w3, w4, packed):
    """x: [B, 35] f32; w*: bf16 padded weights; packed: [8, HPAD] f32 params."""
    B = x.shape[0]
    in_arrays = (x, w1, w2, w3, w4, packed)

    # NOTE: at B=8 a single grid point on one TensorCore is optimal. If B grows
    # to hundreds of rows, add a batch grid axis with dimension_semantics=
    # ("parallel",) and keep weight index_maps constant so weights stay resident
    # -- but BN stats must then be computed over the full batch (two passes).
    # For repeated inference calls, fuse microbatches into one call so the
    # ~0.4 MB of weight DMA is amortized.
    out_pad = pl.pallas_call(
        ffnet_kernel,
        out_shape=jax.ShapeDtypeStruct((B, OPAD), jnp.float32),
        in_specs=[_full_spec(a.shape) for a in in_arrays],
        out_specs=_full_spec((B, OPAD)),
        compiler_params=pltpu.CompilerParams(vmem_limit_bytes=8 << 20),
    )(*in_arrays)
    return out_pad[:, :NUM_CLASSES]


# ----------------------------------------------------------------------------
# Parameter construction (torch-like master params in f32) and kernel packing.
# ----------------------------------------------------------------------------
def init_params(key):
    """Deterministic synthetic parameters matching the torch module's init."""
    keys = jax.random.split(key, 8)
    dims = [(INPUT_SIZE, HIDDEN_SIZE),
            (HIDDEN_SIZE, HIDDEN_SIZE),
            (HIDDEN_SIZE, HIDDEN_SIZE),
            (HIDDEN_SIZE, NUM_CLASSES)]
    params = []
    for li, (fan_in, fan_out) in enumerate(dims):
        kw, kb = keys[2 * li], keys[2 * li + 1]
        bound = 1.0 / jnp.sqrt(float(fan_in))
        w = jax.random.uniform(kw, (fan_in, fan_out), jnp.float32, -bound, bound)
        b = jax.random.uniform(kb, (fan_out,), jnp.float32, -bound, bound)
        params += [w, b]
        if li < 3:  # BatchNorm1d affine params (gamma=1, beta=0 at init)
            params += [jnp.ones((fan_out,), jnp.float32),
                       jnp.zeros((fan_out,), jnp.float32)]
    return tuple(params)


def pack_params(master):
    """Lane-pad + bf16-cast weights; pack the small vectors into one f32 slab."""
    (w1, b1, g1, be1, w2, b2, g2, be2, w3, b3, g3, be3, w4, b4) = master

    def pad2(w, rows, cols):
        out = jnp.zeros((rows, cols), jnp.float32)
        return out.at[: w.shape[0], : w.shape[1]].set(w)

    w1_k = pad2(w1, INPUT_SIZE, HPAD).astype(jnp.bfloat16)
    w2_k = pad2(w2, HPAD, HPAD).astype(jnp.bfloat16)
    w3_k = pad2(w3, HPAD, HPAD).astype(jnp.bfloat16)
    w4_k = pad2(w4, HPAD, OPAD).astype(jnp.bfloat16)

    def padrow(v):
        return jnp.zeros((HPAD,), jnp.float32).at[: v.shape[0]].set(v)

    packed = jnp.stack(
        [padrow(g1), padrow(g2), padrow(g3),
         padrow(be1), padrow(be2), padrow(be3),
         padrow(b4), jnp.zeros((HPAD,), jnp.float32)], axis=0)   # [8, HPAD]
    # b1..b3 are intentionally not packed (cancelled by training-mode BN).
    return w1_k, w2_k, w3_k, w4_k, packed


# ----------------------------------------------------------------------------
# References.
# ----------------------------------------------------------------------------
def ffnet_reference_mixed(x, w1, w2, w3, w4, packed):
    """Exact mirror of the kernel math (bf16 dot inputs, f32 BN)."""
    inv_b = 1.0 / x.shape[0]
    g = packed[0:3]
    beta = packed[3:6]
    b4 = packed[6:7, :OPAD]

    def bn_relu(y, gg, bb):
        s1 = jnp.sum(y, axis=0, keepdims=True)
        s2 = jnp.sum(y * y, axis=0, keepdims=True)
        mu = s1 * inv_b
        var = s2 * inv_b - mu * mu
        return jnp.maximum((y - mu) * jax.lax.rsqrt(var + BN_EPS) * gg + bb, 0.0)

    h = x
    y = jnp.dot(h.astype(jnp.bfloat16), w1, preferred_element_type=jnp.float32)
    h = bn_relu(y, g[0:1], beta[0:1])
    y = jnp.dot(h.astype(jnp.bfloat16), w2, preferred_element_type=jnp.float32)
    h = bn_relu(y, g[1:2], beta[1:2])
    y = jnp.dot(h.astype(jnp.bfloat16), w3, preferred_element_type=jnp.float32)
    h = bn_relu(y, g[2:3], beta[2:3])
    out = jnp.dot(h.astype(jnp.bfloat16), w4, preferred_element_type=jnp.float32) + b4
    return out[:, :NUM_CLASSES]


def ffnet_reference_f32(x, master):
    """Full-precision torch-module semantics (biases included, two-pass BN)."""
    (w1, b1, g1, be1, w2, b2, g2, be2, w3, b3, g3, be3, w4, b4) = master
    h = x
    for w, b, g, be in ((w1, b1, g1, be1), (w2, b2, g2, be2), (w3, b3, g3, be3)):
        y = h @ w + b
        mu = jnp.mean(y, axis=0, keepdims=True)
        var = jnp.mean((y - mu) ** 2, axis=0, keepdims=True)
        h = jnp.maximum((y - mu) / jnp.sqrt(var + BN_EPS) * g + be, 0.0)
    return h @ w4 + b4


if __name__ == "__main__":
    key = jax.random.PRNGKey(0)
    k_x, k_p = jax.random.split(key)
    B = 8
    x = jax.random.normal(k_x, (B, INPUT_SIZE), jnp.float32)

    master = init_params(k_p)
    w1, w2, w3, w4, packed = pack_params(master)

    out = ffnet_forward(x, w1, w2, w3, w4, packed)
    out = jax.block_until_ready(out)
    assert out.shape == (B, NUM_CLASSES)

    # Primary check: kernel matches an exact mixed-precision mirror of its math.
    ref_mixed = ffnet_reference_mixed(x, w1, w2, w3, w4, packed)
    assert jnp.allclose(out, ref_mixed, atol=1e-2, rtol=1e-2), "mismatch vs mixed-precision mirror"

    # Sanity check vs full-f32 torch semantics: bf16 weight/activation storage is
    # a deliberate mixed-precision choice, so allow ~1%-scale deviation.
    ref_f32 = ffnet_reference_f32(x, master)
    assert float(jnp.max(jnp.abs(out - ref_f32))) < 0.15, "mismatch vs f32 torch-semantics reference"

    print("KERNEL_OK")
</pallas_src>

<mosaic_0001>
module attributes {stable_mosaic.version = 11 : i64} {
  func.func @ffnet_kernel(%arg0: memref<8x35xf32, #tpu.memory_space<vmem>>, %arg1: memref<35x384xbf16, #tpu.memory_space<vmem>>, %arg2: memref<384x384xbf16, #tpu.memory_space<vmem>>, %arg3: memref<384x384xbf16, #tpu.memory_space<vmem>>, %arg4: memref<384x128xbf16, #tpu.memory_space<vmem>>, %arg5: memref<8x384xf32, #tpu.memory_space<vmem>>, %arg6: memref<8x128xf32, #tpu.memory_space<vmem>>) attributes {dimension_semantics = [], scalar_prefetch = 0 : i64, scratch_operands = 0 : i64, tpu.core_type = #tpu.core_type<tc>} {
    %c0 = arith.constant 0 : index
    %c0_0 = arith.constant 0 : index
    %0 = vector.load %arg5[%c0, %c0_0] : memref<8x384xf32, #tpu.memory_space<vmem>>, vector<1x384xf32>
    %c1 = arith.constant 1 : index
    %c0_1 = arith.constant 0 : index
    %1 = vector.load %arg5[%c1, %c0_1] : memref<8x384xf32, #tpu.memory_space<vmem>>, vector<1x384xf32>
    %c2 = arith.constant 2 : index
    %c0_2 = arith.constant 0 : index
    %2 = vector.load %arg5[%c2, %c0_2] : memref<8x384xf32, #tpu.memory_space<vmem>>, vector<1x384xf32>
    %c3 = arith.constant 3 : index
    %c0_3 = arith.constant 0 : index
    %3 = vector.load %arg5[%c3, %c0_3] : memref<8x384xf32, #tpu.memory_space<vmem>>, vector<1x384xf32>
    %c4 = arith.constant 4 : index
    %c0_4 = arith.constant 0 : index
    %4 = vector.load %arg5[%c4, %c0_4] : memref<8x384xf32, #tpu.memory_space<vmem>>, vector<1x384xf32>
    %c5 = arith.constant 5 : index
    %c0_5 = arith.constant 0 : index
    %5 = vector.load %arg5[%c5, %c0_5] : memref<8x384xf32, #tpu.memory_space<vmem>>, vector<1x384xf32>
    %c6 = arith.constant 6 : index
    %c0_6 = arith.constant 0 : index
    %6 = vector.load %arg5[%c6, %c0_6] : memref<8x384xf32, #tpu.memory_space<vmem>>, vector<1x128xf32>
    %c0_7 = arith.constant 0 : index
    %c0_8 = arith.constant 0 : index
    %7 = vector.load %arg0[%c0_7, %c0_8] : memref<8x35xf32, #tpu.memory_space<vmem>>, vector<8x35xf32>
    %8 = arith.truncf %7 : vector<8x35xf32> to vector<8x35xbf16>
    %c0_9 = arith.constant 0 : index
    %c0_10 = arith.constant 0 : index
    %9 = vector.load %arg1[%c0_9, %c0_10] : memref<35x384xbf16, #tpu.memory_space<vmem>>, vector<35x384xbf16>
    %cst = arith.constant dense<0.000000e+00> : vector<8x384xf32>
    %10 = tpu.matmul %8, %9, %cst {dimension_numbers = #tpu.dot_dimension_numbers<[1], [0], [0], [1], [0, 0, 1, 1], [], []>} : vector<8x35xbf16>, vector<35x384xbf16>, vector<8x384xf32> -> vector<8x384xf32>
    %cst_11 = arith.constant dense<0.000000e+00> : vector<384xf32>
    %11 = vector.multi_reduction <add>, %10, %cst_11 [0] : vector<8x384xf32> to vector<384xf32>
    %12 = vector.shape_cast %11 : vector<384xf32> to vector<1x384xf32>
    %13 = arith.mulf %10, %10 : vector<8x384xf32>
    %cst_12 = arith.constant dense<0.000000e+00> : vector<384xf32>
    %14 = vector.multi_reduction <add>, %13, %cst_12 [0] : vector<8x384xf32> to vector<384xf32>
    %15 = vector.shape_cast %14 : vector<384xf32> to vector<1x384xf32>
    %cst_13 = arith.constant 1.250000e-01 : f32
    %16 = vector.broadcast %cst_13 : f32 to vector<1x384xf32>
    %17 = arith.mulf %12, %16 : vector<1x384xf32>
    %cst_14 = arith.constant 1.250000e-01 : f32
    %18 = vector.broadcast %cst_14 : f32 to vector<1x384xf32>
    %19 = arith.mulf %15, %18 : vector<1x384xf32>
    %20 = arith.mulf %17, %17 : vector<1x384xf32>
    %21 = arith.subf %19, %20 : vector<1x384xf32>
    %22 = vector.broadcast %17 : vector<1x384xf32> to vector<8x384xf32>
    %23 = arith.subf %10, %22 : vector<8x384xf32>
    %cst_15 = arith.constant 9.99999974E-6 : f32
    %24 = vector.broadcast %cst_15 : f32 to vector<1x384xf32>
    %25 = arith.addf %21, %24 : vector<1x384xf32>
    %26 = math.rsqrt %25 : vector<1x384xf32>
    %27 = vector.broadcast %26 : vector<1x384xf32> to vector<8x384xf32>
    %28 = arith.mulf %23, %27 : vector<8x384xf32>
    %29 = vector.broadcast %0 : vector<1x384xf32> to vector<8x384xf32>
    %30 = arith.mulf %28, %29 : vector<8x384xf32>
    %31 = vector.broadcast %3 : vector<1x384xf32> to vector<8x384xf32>
    %32 = arith.addf %30, %31 : vector<8x384xf32>
    %cst_16 = arith.constant 0.000000e+00 : f32
    %33 = vector.broadcast %cst_16 : f32 to vector<8x384xf32>
    %34 = arith.maximumf %32, %33 : vector<8x384xf32>
    %35 = arith.truncf %34 : vector<8x384xf32> to vector<8x384xbf16>
    %c0_17 = arith.constant 0 : index
    %c0_18 = arith.constant 0 : index
    %36 = vector.load %arg2[%c0_17, %c0_18] : memref<384x384xbf16, #tpu.memory_space<vmem>>, vector<384x384xbf16>
    %cst_19 = arith.constant dense<0.000000e+00> : vector<8x384xf32>
    %37 = tpu.matmul %35, %36, %cst_19 {dimension_numbers = #tpu.dot_dimension_numbers<[1], [0], [0], [1], [0, 0, 1, 1], [], []>} : vector<8x384xbf16>, vector<384x384xbf16>, vector<8x384xf32> -> vector<8x384xf32>
    %cst_20 = arith.constant dense<0.000000e+00> : vector<384xf32>
    %38 = vector.multi_reduction <add>, %37, %cst_20 [0] : vector<8x384xf32> to vector<384xf32>
    %39 = vector.shape_cast %38 : vector<384xf32> to vector<1x384xf32>
    %40 = arith.mulf %37, %37 : vector<8x384xf32>
    %cst_21 = arith.constant dense<0.000000e+00> : vector<384xf32>
    %41 = vector.multi_reduction <add>, %40, %cst_21 [0] : vector<8x384xf32> to vector<384xf32>
    %42 = vector.shape_cast %41 : vector<384xf32> to vector<1x384xf32>
    %cst_22 = arith.constant 1.250000e-01 : f32
    %43 = vector.broadcast %cst_22 : f32 to vector<1x384xf32>
    %44 = arith.mulf %39, %43 : vector<1x384xf32>
    %cst_23 = arith.constant 1.250000e-01 : f32
    %45 = vector.broadcast %cst_23 : f32 to vector<1x384xf32>
    %46 = arith.mulf %42, %45 : vector<1x384xf32>
    %47 = arith.mulf %44, %44 : vector<1x384xf32>
    %48 = arith.subf %46, %47 : vector<1x384xf32>
    %49 = vector.broadcast %44 : vector<1x384xf32> to vector<8x384xf32>
    %50 = arith.subf %37, %49 : vector<8x384xf32>
    %cst_24 = arith.constant 9.99999974E-6 : f32
    %51 = vector.broadcast %cst_24 : f32 to vector<1x384xf32>
    %52 = arith.addf %48, %51 : vector<1x384xf32>
    %53 = math.rsqrt %52 : vector<1x384xf32>
    %54 = vector.broadcast %53 : vector<1x384xf32> to vector<8x384xf32>
    %55 = arith.mulf %50, %54 : vector<8x384xf32>
    %56 = vector.broadcast %1 : vector<1x384xf32> to vector<8x384xf32>
    %57 = arith.mulf %55, %56 : vector<8x384xf32>
    %58 = vector.broadcast %4 : vector<1x384xf32> to vector<8x384xf32>
    %59 = arith.addf %57, %58 : vector<8x384xf32>
    %cst_25 = arith.constant 0.000000e+00 : f32
    %60 = vector.broadcast %cst_25 : f32 to vector<8x384xf32>
    %61 = arith.maximumf %59, %60 : vector<8x384xf32>
    %62 = arith.truncf %61 : vector<8x384xf32> to vector<8x384xbf16>
    %c0_26 = arith.constant 0 : index
    %c0_27 = arith.constant 0 : index
    %63 = vector.load %arg3[%c0_26, %c0_27] : memref<384x384xbf16, #tpu.memory_space<vmem>>, vector<384x384xbf16>
    %cst_28 = arith.constant dense<0.000000e+00> : vector<8x384xf32>
    %64 = tpu.matmul %62, %63, %cst_28 {dimension_numbers = #tpu.dot_dimension_numbers<[1], [0], [0], [1], [0, 0, 1, 1], [], []>} : vector<8x384xbf16>, vector<384x384xbf16>, vector<8x384xf32> -> vector<8x384xf32>
    %cst_29 = arith.constant dense<0.000000e+00> : vector<384xf32>
    %65 = vector.multi_reduction <add>, %64, %cst_29 [0] : vector<8x384xf32> to vector<384xf32>
    %66 = vector.shape_cast %65 : vector<384xf32> to vector<1x384xf32>
    %67 = arith.mulf %64, %64 : vector<8x384xf32>
    %cst_30 = arith.constant dense<0.000000e+00> : vector<384xf32>
    %68 = vector.multi_reduction <add>, %67, %cst_30 [0] : vector<8x384xf32> to vector<384xf32>
    %69 = vector.shape_cast %68 : vector<384xf32> to vector<1x384xf32>
    %cst_31 = arith.constant 1.250000e-01 : f32
    %70 = vector.broadcast %cst_31 : f32 to vector<1x384xf32>
    %71 = arith.mulf %66, %70 : vector<1x384xf32>
    %cst_32 = arith.constant 1.250000e-01 : f32
    %72 = vector.broadcast %cst_32 : f32 to vector<1x384xf32>
    %73 = arith.mulf %69, %72 : vector<1x384xf32>
    %74 = arith.mulf %71, %71 : vector<1x384xf32>
    %75 = arith.subf %73, %74 : vector<1x384xf32>
    %76 = vector.broadcast %71 : vector<1x384xf32> to vector<8x384xf32>
    %77 = arith.subf %64, %76 : vector<8x384xf32>
    %cst_33 = arith.constant 9.99999974E-6 : f32
    %78 = vector.broadcast %cst_33 : f32 to vector<1x384xf32>
    %79 = arith.addf %75, %78 : vector<1x384xf32>
    %80 = math.rsqrt %79 : vector<1x384xf32>
    %81 = vector.broadcast %80 : vector<1x384xf32> to vector<8x384xf32>
    %82 = arith.mulf %77, %81 : vector<8x384xf32>
    %83 = vector.broadcast %2 : vector<1x384xf32> to vector<8x384xf32>
    %84 = arith.mulf %82, %83 : vector<8x384xf32>
    %85 = vector.broadcast %5 : vector<1x384xf32> to vector<8x384xf32>
    %86 = arith.addf %84, %85 : vector<8x384xf32>
    %cst_34 = arith.constant 0.000000e+00 : f32
    %87 = vector.broadcast %cst_34 : f32 to vector<8x384xf32>
    %88 = arith.maximumf %86, %87 : vector<8x384xf32>
    %89 = arith.truncf %88 : vector<8x384xf32> to vector<8x384xbf16>
    %c0_35 = arith.constant 0 : index
    %c0_36 = arith.constant 0 : index
    %90 = vector.load %arg4[%c0_35, %c0_36] : memref<384x128xbf16, #tpu.memory_space<vmem>>, vector<384x128xbf16>
    %cst_37 = arith.constant dense<0.000000e+00> : vector<8x128xf32>
    %91 = tpu.matmul %89, %90, %cst_37 {dimension_numbers = #tpu.dot_dimension_numbers<[1], [0], [0], [1], [0, 0, 1, 1], [], []>} : vector<8x384xbf16>, vector<384x128xbf16>, vector<8x128xf32> -> vector<8x128xf32>
    %92 = vector.broadcast %6 : vector<1x128xf32> to vector<8x128xf32>
    %93 = arith.addf %91, %92 : vector<8x128xf32>
    %c0_38 = arith.constant 0 : index
    %c0_39 = arith.constant 0 : index
    %94 = vector.load %arg6[%c0_38, %c0_39] : memref<8x128xf32, #tpu.memory_space<vmem>>, vector<8x128xf32>
    tpu.vector_store %arg6[%c0_38, %c0_39], %93 {strides = array<i32>} : memref<8x128xf32, #tpu.memory_space<vmem>>, vector<8x128xf32>,
    return
  }
}

</mosaic_0001>

<llo_original>
// kernel: tpu_custom_call.1
$region0: #{tpu_custom_call.1}
  #allocation0 [shape = 'u32[]', space=smem, size = 0x4, offset = 0x4, fixed_abs, tag = 'smem constant byte address 0x4 - core index']
  #allocation1 [shape = 'u32[144,128]{1,0:T(1,128)}', space=vmem, size = 0x12000, scoped, tag = 'internal scratch']
  %s0 = inlined_call_operand.hbm [shape: f32[8,35], index: 0, kind: input, shape index: {}]
  %s1 = inlined_call_operand.hbm [shape: bf16[35,384], index: 1, kind: input, shape index: {}]
  %s2 = inlined_call_operand.hbm [shape: bf16[384,384], index: 2, kind: input, shape index: {}]
  %s3 = inlined_call_operand.hbm [shape: bf16[384,384], index: 3, kind: input, shape index: {}]
  %s4 = inlined_call_operand.hbm [shape: bf16[384,128], index: 4, kind: input, shape index: {}]
  %s5 = inlined_call_operand.hbm [shape: f32[8,384], index: 5, kind: input, shape index: {}]
  %s6 = inlined_call_operand.hbm [shape: f32[8,128], index: 6, kind: output, shape index: {}]
  %s7 = sld [smem:[#allocation0]]
  $region58: #{tpu_custom_call.1} parent=0
    _
  %s9 = ssub.s32 1, %s7
  %s10 = scalar_select 0, %s9, %s7
  $region1: #{tpu_custom_call.1} parent=0
    #allocation2 [shape = 'u8[4096]{0}', space=vmem, size = 0x1000, scoped, tag = 'input window, operand 0, single buffered']
    #allocation3 [shape = 's32[1]{0}', space=sflag, size = 0x4, scoped, tag = 'scoped memory for tpu_custom_call.1']
    #allocation4 [shape = 's32[1]{0}', space=sflag, size = 0x4, scoped, tag = 'scoped memory for tpu_custom_call.1']
    #allocation5 [shape = 'u8[30720]{0}', space=vmem, size = 0x7800, scoped, tag = 'input window, operand 1, single buffered']
    #allocation6 [shape = 's32[1]{0}', space=sflag, size = 0x4, scoped, tag = 'scoped memory for tpu_custom_call.1']
    #allocation7 [shape = 'u8[294912]{0}', space=vmem, size = 0x48000, scoped, tag = 'input window, operand 2, single buffered']
    #allocation8 [shape = 'u8[294912]{0}', space=vmem, size = 0x48000, scoped, tag = 'input window, operand 3, single buffered']
    #allocation9 [shape = 's32[1]{0}', space=sflag, size = 0x4, scoped, tag = 'scoped memory for tpu_custom_call.1']
    #allocation10 [shape = 'u8[98304]{0}', space=vmem, size = 0x18000, scoped, tag = 'input window, operand 4, single buffered']
    #allocation11 [shape = 'u8[12288]{0}', space=vmem, size = 0x3000, scoped, tag = 'input window, operand 5, single buffered']
    #allocation12 [shape = 's32[1]{0}', space=sflag, size = 0x4, scoped, tag = 'scoped memory for tpu_custom_call.1']
    #allocation13 [shape = 'u8[4096]{0}', space=vmem, size = 0x1000, scoped, tag = 'output window, operand 0, single buffered']
    %11 = vsyncpa [#allocation3], 0
    %12 = vsyncpa [#allocation6], 0
    %13 = vsyncpa [#allocation9], 0
    %14 = vsyncpa [#allocation12], 0
    %15 = vsyncpa [#allocation4], 0
    // Predicated region
    $region2: #{tpu_custom_call.1} parent=1 // pred_check
      _
    $region3: #{tpu_custom_call.1} parent=1 // pred_check_branch
      %17 = sbr.rel (0) target = $region5
    $region4: #{tpu_custom_call.1} parent=1 // pred_region
      %s19 = ssub.s32 128, 128
      %20 = vsyncadd [#allocation3], %s19
      %s22 = sshll.u32 [#allocation2], 4
      %s23 = int_to_ptr.vmem [resolvable:$true] %s22
      %25 = dma.hbm_to_vmem [thread:$0]  %s0, 128, %s23, [#allocation3]
    $region5: #{tpu_custom_call.1} parent=1 // pred_fallthru
      _
    // Predicated region
    $region6: #{tpu_custom_call.1} parent=1 // pred_check
      _
    $region7: #{tpu_custom_call.1} parent=1 // pred_check_branch
      %27 = sbr.rel (0) target = $region9
    $region8: #{tpu_custom_call.1} parent=1 // pred_region
      %s29 = ssub.s32 960, 960
      %30 = vsyncadd [#allocation6], %s29
      %s31 = sshll.u32 [#allocation5], 4
      %s32 = int_to_ptr.vmem [resolvable:$true] %s31
      %37 = dma.hbm_to_vmem [thread:$0]  %s1, 960, %s32, [#allocation6], 192, 192, 12
    $region9: #{tpu_custom_call.1} parent=1 // pred_fallthru
      _
    // Predicated region
    $region10: #{tpu_custom_call.1} parent=1 // pred_check
      _
    $region11: #{tpu_custom_call.1} parent=1 // pred_check_branch
      %39 = sbr.rel (0) target = $region13
    $region12: #{tpu_custom_call.1} parent=1 // pred_region
      %s41 = ssub.s32 9216, 9216
      %42 = vsyncadd [#allocation6], %s41
      %s43 = sshll.u32 [#allocation7], 4
      %s44 = int_to_ptr.vmem [resolvable:$true] %s43
      %49 = dma.hbm_to_vmem [thread:$0]  %s2, 9216, %s44, [#allocation6], 192, 192, 12
    $region13: #{tpu_custom_call.1} parent=1 // pred_fallthru
      _
    // Predicated region
    $region14: #{tpu_custom_call.1} parent=1 // pred_check
      _
    $region15: #{tpu_custom_call.1} parent=1 // pred_check_branch
      %51 = sbr.rel (0) target = $region17
    $region16: #{tpu_custom_call.1} parent=1 // pred_region
      %s53 = ssub.s32 9216, 9216
      %54 = vsyncadd [#allocation9], %s53
      %s55 = sshll.u32 [#allocation8], 4
      %s56 = int_to_ptr.vmem [resolvable:$true] %s55
      %61 = dma.hbm_to_vmem [thread:$0]  %s3, 9216, %s56, [#allocation9], 192, 192, 12
    $region17: #{tpu_custom_call.1} parent=1 // pred_fallthru
      _
    // Predicated region
    $region18: #{tpu_custom_call.1} parent=1 // pred_check
      _
    $region19: #{tpu_custom_call.1} parent=1 // pred_check_branch
      %63 = sbr.rel (0) target = $region21
    $region20: #{tpu_custom_call.1} parent=1 // pred_region
      %s65 = ssub.s32 3072, 3072
      %66 = vsyncadd [#allocation9], %s65
      %s67 = sshll.u32 [#allocation10], 4
      %s68 = int_to_ptr.vmem [resolvable:$true] %s67
      %73 = dma.hbm_to_vmem [thread:$0]  %s4, 3072, %s68, [#allocation9], 64, 64, 4
    $region21: #{tpu_custom_call.1} parent=1 // pred_fallthru
      _
    // Predicated region
    $region22: #{tpu_custom_call.1} parent=1 // pred_check
      _
    $region23: #{tpu_custom_call.1} parent=1 // pred_check_branch
      %75 = sbr.rel (0) target = $region25
    $region24: #{tpu_custom_call.1} parent=1 // pred_region
      %s77 = ssub.s32 384, 384
      %78 = vsyncadd [#allocation12], %s77
      %s80 = sshll.u32 [#allocation11], 4
      %s81 = int_to_ptr.vmem [resolvable:$true] %s80
      %83 = dma.hbm_to_vmem [thread:$0]  %s5, 384, %s81, [#allocation12]
    $region25: #{tpu_custom_call.1} parent=1 // pred_fallthru
      _
    // Predicated region
    $region26: #{tpu_custom_call.1} parent=1 // pred_check
      _
    $region27: #{tpu_custom_call.1} parent=1 // pred_check_branch
      %85 = sbr.rel (0) target = $region29
    $region28: #{tpu_custom_call.1} parent=1 // pred_region
      %86 = dma.done [#allocation3], 128
    $region29: #{tpu_custom_call.1} parent=1 // pred_fallthru
      _
    // Predicated region
    $region30: #{tpu_custom_call.1} parent=1 // pred_check
      _
    $region31: #{tpu_custom_call.1} parent=1 // pred_check_branch
      %88 = sbr.rel (0) target = $region33
    $region32: #{tpu_custom_call.1} parent=1 // pred_region
      %89 = dma.done [#allocation6], 960
    $region33: #{tpu_custom_call.1} parent=1 // pred_fallthru
      _
    // Predicated region
    $region34: #{tpu_custom_call.1} parent=1 // pred_check
      _
    $region35: #{tpu_custom_call.1} parent=1 // pred_check_branch
      %91 = sbr.rel (0) target = $region37
    $region36: #{tpu_custom_call.1} parent=1 // pred_region
      %92 = dma.done [#allocation6], 9216
    $region37: #{tpu_custom_call.1} parent=1 // pred_fallthru
      _
    // Predicated region
    $region38: #{tpu_custom_call.1} parent=1 // pred_check
      _
    $region39: #{tpu_custom_call.1} parent=1 // pred_check_branch
      %94 = sbr.rel (0) target = $region41
    $region40: #{tpu_custom_call.1} parent=1 // pred_region
      %95 = dma.done [#allocation9], 9216
    $region41: #{tpu_custom_call.1} parent=1 // pred_fallthru
      _
    // Predicated region
    $region42: #{tpu_custom_call.1} parent=1 // pred_check
      _
    $region43: #{tpu_custom_call.1} parent=1 // pred_check_branch
      %97 = sbr.rel (0) target = $region45
    $region44: #{tpu_custom_call.1} parent=1 // pred_region
      %98 = dma.done [#allocation9], 3072
    $region45: #{tpu_custom_call.1} parent=1 // pred_fallthru
      _
    // Predicated region
    $region46: #{tpu_custom_call.1} parent=1 // pred_check
      _
    $region47: #{tpu_custom_call.1} parent=1 // pred_check_branch
      %100 = sbr.rel (0) target = $region49
    $region48: #{tpu_custom_call.1} parent=1 // pred_region
      %101 = dma.done [#allocation12], 384
    $region49: #{tpu_custom_call.1} parent=1 // pred_fallthru
      _
    %v103 = vld [vmem:[#allocation11] ss:$8 sm:$0x7]
    %s104 = scalar_lea.vmem [#allocation11], 1
    %v105 = vld [vmem:[%s104] ss:$8 sm:$0x7]
    %s106 = scalar_lea.vmem [#allocation11], 2
    %v107 = vld [vmem:[%s106] ss:$8 sm:$0x7]
    %s108 = scalar_lea.vmem [#allocation11], 3
    %v109 = vld [vmem:[%s108] ss:$8 sm:$0x7]
    %s110 = scalar_lea.vmem [#allocation11], 4
    %v111 = vld [vmem:[%s110] ss:$8 sm:$0x7]
    %s112 = scalar_lea.vmem [#allocation11], 5
    %v113 = vld [vmem:[%s112] ss:$8 sm:$0x7]
    %v114 = vld [vmem:[#allocation11 + $0x6] ss:$0 sm:$0xff]
    %v115 = vld [vmem:[#allocation2] sm:$0xff]
    %v116 = vpack.c.bf16 %v115, %v115
    %v117 = vld [vmem:[#allocation5] sm:$0xff]
    %v118 = vld [vmem:[#allocation5 + $0x8] sm:$0xf]
    %v119 = vld [vmem:[#allocation5 + $0xc] sm:$0xff]
    %v120 = vld [vmem:[#allocation5 + $0x14] sm:$0xf]
    %v121 = vld [vmem:[#allocation5 + $0x18] sm:$0xff]
    %v122 = vld [vmem:[#allocation5 + $0x20] sm:$0xf]
    %v123 = vld [vmem:[#allocation5 + $0x24] sm:$0xff]
    %v124 = vld [vmem:[#allocation5 + $0x2c] sm:$0xf]
    %v125 = vld [vmem:[#allocation5 + $0x30] sm:$0x33]
    %v126 = vld [vmem:[#allocation5 + $0x38] sm:$0x3]
    %v137 = vunpack.c.l.b16 %v117
    %v138 = vunpack.c.h.b16 %v117
    %v139 = vunpack.c.l.b16 %v118
    %v140 = vunpack.c.l.b16 %v119
    %v141 = vunpack.c.h.b16 %v119
    %v142 = vunpack.c.l.b16 %v120
    %v143 = vunpack.c.l.b16 %v121
    %v144 = vunpack.c.h.b16 %v121
    %v145 = vunpack.c.l.b16 %v122
    %v146 = vunpack.c.l.b16 %v123
    %v147 = vunpack.c.h.b16 %v123
    %v148 = vunpack.c.l.b16 %v124
    %v149 = vunpack.c.l.b16 %v125
    %v150 = vunpack.c.h.b16 %v125
    %v151 = vunpack.c.l.b16 %v126
    %v152 = vpack.c.b16 %v140, %v137
    %v153 = vpack.c.b16 %v141, %v138
    %v154 = vpack.c.b16 %v142, %v139
    %v155 = vpack.c.b16 %v146, %v143
    %v156 = vpack.c.b16 %v147, %v144
    %v157 = vpack.c.b16 %v148, %v145
    %v158 = vpack.c.b16 %v149, %v149
    %v159 = vpack.c.b16 %v150, %v150
    %v160 = vpack.c.b16 %v151, %v151
    %vm167 = vcmask 285696
    %v169 = vsel %vm167, %v116, 0
    %vm171 = vcmask 1040384
    %vm172 = vcmask 1041408
    %v173 = vsel %vm171, 4294967295, 65535
    %v174 = vsel %vm172, %v173, 0
    %v176 = vand.u32 %v158, %v174
    %v179 = vand.u32 %v159, %v174
    %v182 = vand.u32 %v160, %v174
    %184 = vmatprep.subr.bf16.mxu0 %v153
    %185 = vmatpush1.bf16.msra.mxu0 %v152
    %186 = vmatprep.subr.bf16.mxu0 %v156
    %187 = vmatpush1.bf16.msra.mxu0 %v155
    %188 = vmatprep.subr.bf16.mxu0 %v179
    %189 = vmatpush1.bf16.msra.mxu0 %v176
    %190 = vmatprep.subr.bf16.mxu0 0
    %191 = vmatpush1.bf16.msra.mxu0 0
    %192 = vmatprep.subr.bf16.mxu0 0
    %193 = vmatpush1.bf16.msra.mxu0 0
    %194 = vmatprep.subr.bf16.mxu0 0
    %195 = vmatpush1.bf16.msra.mxu0 0
    %196 = vmatprep.subr.bf16.mxu0 0
    %197 = vmatpush1.bf16.msra.mxu0 0
    %198 = vmatprep.subr.bf16.mxu0 0
    %199 = vmatpush1.bf16.msra.mxu0 0
    %200 = vmatprep.subr.bf16.mxu0 0
    %201 = vmatpush1.bf16.msra.mxu0 0
    %202 = vmatprep.subr.bf16.mxu0 0
    %203 = vmatpush1.bf16.msra.mxu0 0
    %204 = vmatprep.subr.bf16.mxu0 0
    %205 = vmatpush1.bf16.msra.mxu0 0
    %206 = vmatprep.subr.bf16.mxu0 0
    %207 = vmatpush1.bf16.msra.mxu0 0
    %208 = vmatprep.subr.bf16.mxu0 0
    %209 = vmatpush1.bf16.msra.mxu0 0
    %210 = vmatprep.subr.bf16.mxu0 0
    %211 = vmatpush1.bf16.msra.mxu0 0
    %212 = vmatprep.subr.bf16.mxu0 0
    %213 = vmatpush1.bf16.msra.mxu0 0
    %214 = vmatprep.subr.bf16.mxu0 0
    %215 = vmatpush1.bf16.msra.mxu0 0
    %216 = vmatprep.mubr.bf16.mxu0 0
    %217 = vmatmul.mubr.bf16.gmra.mrb[0].mxu0 %v169
    %v218 = vpop.f32.mrb[0].mxu0
    %v219 = vadd.f32 0.0, %v218
    %v220 = vpop.f32.mrb[0].mxu0
    %v221 = vadd.f32 0.0, %v220
    %v222 = vpop.f32.mrb[0].mxu0
    %v223 = vpop.f32.mrb[0].mxu0
    %224 = vdwg.mxu0
    %225 = vmatprep.subr.bf16.mxu0 0
    %226 = vmatpush1.bf16.msra.mxu0 %v154
    %227 = vmatprep.subr.bf16.mxu0 0
    %228 = vmatpush1.bf16.msra.mxu0 %v157
    %229 = vmatprep.subr.bf16.mxu0 0
    %230 = vmatpush1.bf16.msra.mxu0 %v182
    %231 = vmatprep.subr.bf16.mxu0 0
    %232 = vmatpush1.bf16.msra.mxu0 0
    %233 = vmatprep.subr.bf16.mxu0 0
    %234 = vmatpush1.bf16.msra.mxu0 0
    %235 = vmatprep.subr.bf16.mxu0 0
    %236 = vmatpush1.bf16.msra.mxu0 0
    %237 = vmatprep.subr.bf16.mxu0 0
    %238 = vmatpush1.bf16.msra.mxu0 0
    %239 = vmatprep.subr.bf16.mxu0 0
    %240 = vmatpush1.bf16.msra.mxu0 0
    %241 = vmatprep.subr.bf16.mxu0 0
    %242 = vmatpush1.bf16.msra.mxu0 0
    %243 = vmatprep.subr.bf16.mxu0 0
    %244 = vmatpush1.bf16.msra.mxu0 0
    %245 = vmatprep.subr.bf16.mxu0 0
    %246 = vmatpush1.bf16.msra.mxu0 0
    %247 = vmatprep.subr.bf16.mxu0 0
    %248 = vmatpush1.bf16.msra.mxu0 0
    %249 = vmatprep.subr.bf16.mxu0 0
    %250 = vmatpush1.bf16.msra.mxu0 0
    %251 = vmatprep.subr.bf16.mxu0 0
    %252 = vmatpush1.bf16.msra.mxu0 0
    %253 = vmatprep.subr.bf16.mxu0 0
    %254 = vmatpush1.bf16.msra.mxu0 0
    %255 = vmatprep.subr.bf16.mxu0 0
    %256 = vmatpush1.bf16.msra.mxu0 0
    %257 = vmatprep.mubr.bf16.mxu0 0
    %258 = vmatmul.mubr.bf16.gmra.mrb[0].mxu0 %v169
    %v259 = vpop.f32.mrb[0].mxu0
    %v260 = vadd.f32 0.0, %v259
    %v261 = vpop.f32.mrb[0].mxu0
    %v262 = vpop.f32.mrb[0].mxu0
    %v263 = vpop.f32.mrb[0].mxu0
    %264 = vdwg.mxu0
    %v265 = vrot.slane %v219, 4
    %v266 = vadd.f32 %v219, %v265
    %v267 = vrot.slane %v266, 2
    %v268 = vadd.f32 %v266, %v267
    %v269 = vrot.slane %v268, 1
    %v270 = vadd.f32 %v268, %v269
    %v271 = vrot.slane %v221, 4
    %v272 = vadd.f32 %v221, %v271
    %v273 = vrot.slane %v272, 2
    %v274 = vadd.f32 %v272, %v273
    %v275 = vrot.slane %v274, 1
    %v276 = vadd.f32 %v274, %v275
    %v277 = vrot.slane %v260, 4
    %v278 = vadd.f32 %v260, %v277
    %v279 = vrot.slane %v278, 2
    %v280 = vadd.f32 %v278, %v279
    %v281 = vrot.slane %v280, 1
    %v282 = vadd.f32 %v280, %v281
    %v283 = vmul.f32 %v219, %v219
    %v284 = vmul.f32 %v221, %v221
    %v285 = vmul.f32 %v260, %v260
    %v286 = vrot.slane %v283, 4
    %v287 = vadd.f32 %v283, %v286
    %v288 = vrot.slane %v287, 2
    %v289 = vadd.f32 %v287, %v288
    %v290 = vrot.slane %v289, 1
    %v291 = vadd.f32 %v289, %v290
    %v292 = vrot.slane %v284, 4
    %v293 = vadd.f32 %v284, %v292
    %v294 = vrot.slane %v293, 2
    %v295 = vadd.f32 %v293, %v294
    %v296 = vrot.slane %v295, 1
    %v297 = vadd.f32 %v295, %v296
    %v298 = vrot.slane %v285, 4
    %v299 = vadd.f32 %v285, %v298
    %v300 = vrot.slane %v299, 2
    %v301 = vadd.f32 %v299, %v300
    %v302 = vrot.slane %v301, 1
    %v303 = vadd.f32 %v301, %v302
    %v304 = vmul.f32 %v270, 0.125
    %v305 = vmul.f32 %v276, 0.125
    %v306 = vmul.f32 %v282, 0.125
    %v307 = vmul.f32 %v291, 0.125
    %v308 = vmul.f32 %v297, 0.125
    %v309 = vmul.f32 %v303, 0.125
    %v310 = vmul.f32 %v304, %v304
    %v311 = vmul.f32 %v305, %v305
    %v312 = vmul.f32 %v306, %v306
    %v313 = vsub.f32 %v307, %v310
    %v314 = vsub.f32 %v308, %v311
    %v315 = vsub.f32 %v309, %v312
    %v316 = vsub.f32 %v219, %v304
    %v317 = vsub.f32 %v221, %v305
    %v318 = vsub.f32 %v260, %v306
    %v319 = vadd.f32 %v313, 1e-05
    %v320 = vadd.f32 %v314, 1e-05
    %v321 = vadd.f32 %v315, 1e-05
    %v322 = vrsqrt.pop %v319
    %v323 = vrsqrt.pop %v320
    %v324 = vrsqrt.pop %v321
    %v325 = vmul.f32 %v316, %v322
    %v326 = vmul.f32 %v317, %v323
    %v327 = vmul.f32 %v318, %v324
    %v329 = vlaneseq
    %v330 = vshrl.u32 %v329, 7
    %v331 = vsub.s32 0, %v330
    %v332 = vrot.slane %v103, %v331
    %v333 = vlaneseq
    %v334 = vshrl.u32 %v333, 7
    %v335 = vsub.s32 1, %v334
    %v336 = vrot.slane %v103, %v335
    %v337 = vlaneseq
    %v338 = vshrl.u32 %v337, 7
    %v339 = vsub.s32 2, %v338
    %v340 = vrot.slane %v103, %v339
    %v344 = vmul.f32 %v325, %v332
    %v345 = vmul.f32 %v326, %v336
    %v346 = vmul.f32 %v327, %v340
    %v348 = vlaneseq
    %v349 = vshrl.u32 %v348, 7
    %v350 = vsub.s32 0, %v349
    %v351 = vrot.slane %v109, %v350
    %v352 = vlaneseq
    %v353 = vshrl.u32 %v352, 7
    %v354 = vsub.s32 1, %v353
    %v355 = vrot.slane %v109, %v354
    %v356 = vlaneseq
    %v357 = vshrl.u32 %v356, 7
    %v358 = vsub.s32 2, %v357
    %v359 = vrot.slane %v109, %v358
    %v363 = vadd.f32 %v344, %v351
    %v364 = vadd.f32 %v345, %v355
    %v365 = vadd.f32 %v346, %v359
    %v366 = vmax.f32 %v363, 0.0
    %v367 = vmax.f32 %v364, 0.0
    %v368 = vmax.f32 %v365, 0.0
    %v369 = vpack.c.bf16 %v366, %v366
    %v370 = vpack.c.bf16 %v367, %v367
    %v371 = vpack.c.bf16 %v368, %v368
    %v372 = vld [vmem:[#allocation7] sm:$0xff]
    %v373 = vld [vmem:[#allocation7 + $0x8] sm:$0xf]
    %v374 = vld [vmem:[#allocation7 + $0xc] sm:$0xff]
    %v375 = vld [vmem:[#allocation7 + $0x14] sm:$0xf]
    %v376 = vld [vmem:[#allocation7 + $0x18] sm:$0xff]
    %v377 = vld [vmem:[#allocation7 + $0x20] sm:$0xf]
    %v378 = vld [vmem:[#allocation7 + $0x24] sm:$0xff]
    %v379 = vld [vmem:[#allocation7 + $0x2c] sm:$0xf]
    %v380 = vld [vmem:[#allocation7 + $0x30] sm:$0xff]
    %v381 = vld [vmem:[#allocation7 + $0x38] sm:$0xf]
    %v382 = vld [vmem:[#allocation7 + $0x3c] sm:$0xff]
    %v383 = vld [vmem:[#allocation7 + $0x44] sm:$0xf]
    %v384 = vld [vmem:[#allocation7 + $0x48] sm:$0xff]
    %v385 = vld [vmem:[#allocation7 + $0x50] sm:$0xf]
    %v386 = vld [vmem:[#allocation7 + $0x54] sm:$0xff]
    %v387 = vld [vmem:[#allocation7 + $0x5c] sm:$0xf]
    %v388 = vld [vmem:[#allocation7 + $0x60] sm:$0xff]
    %v389 = vld [vmem:[#allocation7 + $0x68] sm:$0xf]
    %v390 = vld [vmem:[#allocation7 + $0x6c] sm:$0xff]
    %v391 = vld [vmem:[#allocation7 + $0x74] sm:$0xf]
    %v392 = vld [vmem:[#allocation7 + $0x78] sm:$0xff]
    %v393 = vld [vmem:[#allocation7 + $0x80] sm:$0xf]
    %v394 = vld [vmem:[#allocation7 + $0x84] sm:$0xff]
    %v395 = vld [vmem:[#allocation7 + $0x8c] sm:$0xf]
    %v396 = vld [vmem:[#allocation7 + $0x90] sm:$0xff]
    %v397 = vld [vmem:[#allocation7 + $0x98] sm:$0xf]
    %v398 = vld [vmem:[#allocation7 + $0x9c] sm:$0xff]
    %v399 = vld [vmem:[#allocation7 + $0xa4] sm:$0xf]
    %v400 = vld [vmem:[#allocation7 + $0xa8] sm:$0xff]
    %v401 = vld [vmem:[#allocation7 + $0xb0] sm:$0xf]
    %v402 = vld [vmem:[#allocation7 + $0xb4] sm:$0xff]
    %v403 = vld [vmem:[#allocation7 + $0xbc] sm:$0xf]
    %v404 = vld [vmem:[#allocation7 + $0xc0] sm:$0xff]
    %v405 = vld [vmem:[#allocation7 + $0xc8] sm:$0xf]
    %v406 = vld [vmem:[#allocation7 + $0xcc] sm:$0xff]
    %v407 = vld [vmem:[#allocation7 + $0xd4] sm:$0xf]
    %v408 = vld [vmem:[#allocation7 + $0xd8] sm:$0xff]
    %v409 = vld [vmem:[#allocation7 + $0xe0] sm:$0xf]
    %v410 = vld [vmem:[#allocation7 + $0xe4] sm:$0xff]
    %v411 = vld [vmem:[#allocation7 + $0xec] sm:$0xf]
    %v412 = vld [vmem:[#allocation7 + $0xf0] sm:$0xff]
    %v413 = vld [vmem:[#allocation7 + $0xf8] sm:$0xf]
    %v414 = vld [vmem:[#allocation7 + $0xfc] sm:$0xff]
    %v415 = vld [vmem:[#allocation7 + $0x104] sm:$0xf]
    %v416 = vld [vmem:[#allocation7 + $0x108] sm:$0xff]
    %v417 = vld [vmem:[#allocation7 + $0x110] sm:$0xf]
    %v418 = vld [vmem:[#allocation7 + $0x114] sm:$0xff]
    %v419 = vld [vmem:[#allocation7 + $0x11c] sm:$0xf]
    %v420 = vld [vmem:[#allocation7 + $0x120] sm:$0xff]
    %v421 = vld [vmem:[#allocation7 + $0x128] sm:$0xf]
    %v422 = vld [vmem:[#allocation7 + $0x12c] sm:$0xff]
    %v423 = vld [vmem:[#allocation7 + $0x134] sm:$0xf]
    %v424 = vld [vmem:[#allocation7 + $0x138] sm:$0xff]
    %v425 = vld [vmem:[#allocation7 + $0x140] sm:$0xf]
    %v426 = vld [vmem:[#allocation7 + $0x144] sm:$0xff]
    %v427 = vld [vmem:[#allocation7 + $0x14c] sm:$0xf]
    %v428 = vld [vmem:[#allocation7 + $0x150] sm:$0xff]
    %v429 = vld [vmem:[#allocation7 + $0x158] sm:$0xf]
    %v430 = vld [vmem:[#allocation7 + $0x15c] sm:$0xff]
    %v431 = vld [vmem:[#allocation7 + $0x164] sm:$0xf]
    %v432 = vld [vmem:[#allocation7 + $0x168] sm:$0xff]
    %v433 = vld [vmem:[#allocation7 + $0x170] sm:$0xf]
    %v434 = vld [vmem:[#allocation7 + $0x174] sm:$0xff]
    %v435 = vld [vmem:[#allocation7 + $0x17c] sm:$0xf]
    %v436 = vld [vmem:[#allocation7 + $0x180] sm:$0xff]
    %v437 = vld [vmem:[#allocation7 + $0x188] sm:$0xf]
    %v438 = vld [vmem:[#allocation7 + $0x18c] sm:$0xff]
    %v439 = vld [vmem:[#allocation7 + $0x194] sm:$0xf]
    %v440 = vld [vmem:[#allocation7 + $0x198] sm:$0xff]
    %v441 = vld [vmem:[#allocation7 + $0x1a0] sm:$0xf]
    %v442 = vld [vmem:[#allocation7 + $0x1a4] sm:$0xff]
    %v443 = vld [vmem:[#allocation7 + $0x1ac] sm:$0xf]
    %v444 = vld [vmem:[#allocation7 + $0x1b0] sm:$0xff]
    %v445 = vld [vmem:[#allocation7 + $0x1b8] sm:$0xf]
    %v446 = vld [vmem:[#allocation7 + $0x1bc] sm:$0xff]
    %v447 = vld [vmem:[#allocation7 + $0x1c4] sm:$0xf]
    %v448 = vld [vmem:[#allocation7 + $0x1c8] sm:$0xff]
    %v449 = vld [vmem:[#allocation7 + $0x1d0] sm:$0xf]
    %v450 = vld [vmem:[#allocation7 + $0x1d4] sm:$0xff]
    %v451 = vld [vmem:[#allocation7 + $0x1dc] sm:$0xf]
    %v452 = vld [vmem:[#allocation7 + $0x1e0] sm:$0xff]
    %v453 = vld [vmem:[#allocation7 + $0x1e8] sm:$0xf]
    %v454 = vld [vmem:[#allocation7 + $0x1ec] sm:$0xff]
    %v455 = vld [vmem:[#allocation7 + $0x1f4] sm:$0xf]
    %v456 = vld [vmem:[#allocation7 + $0x1f8] sm:$0xff]
    %v457 = vld [vmem:[#allocation7 + $0x200] sm:$0xf]
    %v458 = vld [vmem:[#allocation7 + $0x204] sm:$0xff]
    %v459 = vld [vmem:[#allocation7 + $0x20c] sm:$0xf]
    %v460 = vld [vmem:[#allocation7 + $0x210] sm:$0xff]
    %v461 = vld [vmem:[#allocation7 + $0x218] sm:$0xf]
    %v462 = vld [vmem:[#allocation7 + $0x21c] sm:$0xff]
    %v463 = vld [vmem:[#allocation7 + $0x224] sm:$0xf]
    %v464 = vld [vmem:[#allocation7 + $0x228] sm:$0xff]
    %v465 = vld [vmem:[#allocation7 + $0x230] sm:$0xf]
    %v466 = vld [vmem:[#allocation7 + $0x234] sm:$0xff]
    %v467 = vld [vmem:[#allocation7 + $0x23c] sm:$0xf]
    %v564 = vunpack.c.l.b16 %v372
    %v565 = vunpack.c.h.b16 %v372
    %v566 = vunpack.c.l.b16 %v373
    %v567 = vunpack.c.l.b16 %v374
    %v568 = vunpack.c.h.b16 %v374
    %v569 = vunpack.c.l.b16 %v375
    %v570 = vunpack.c.l.b16 %v376
    %v571 = vunpack.c.h.b16 %v376
    %v572 = vunpack.c.l.b16 %v377
    %v573 = vunpack.c.l.b16 %v378
    %v574 = vunpack.c.h.b16 %v378
    %v575 = vunpack.c.l.b16 %v379
    %v576 = vunpack.c.l.b16 %v380
    %v577 = vunpack.c.h.b16 %v380
    %v578 = vunpack.c.l.b16 %v381
    %v579 = vunpack.c.l.b16 %v382
    %v580 = vunpack.c.h.b16 %v382
    %v581 = vunpack.c.l.b16 %v383
    %v582 = vunpack.c.l.b16 %v384
    %v583 = vunpack.c.h.b16 %v384
    %v584 = vunpack.c.l.b16 %v385
    %v585 = vunpack.c.l.b16 %v386
    %v586 = vunpack.c.h.b16 %v386
    %v587 = vunpack.c.l.b16 %v387
    %v588 = vunpack.c.l.b16 %v388
    %v589 = vunpack.c.h.b16 %v388
    %v590 = vunpack.c.l.b16 %v389
    %v591 = vunpack.c.l.b16 %v390
    %v592 = vunpack.c.h.b16 %v390
    %v593 = vunpack.c.l.b16 %v391
    %v594 = vunpack.c.l.b16 %v392
    %v595 = vunpack.c.h.b16 %v392
    %v596 = vunpack.c.l.b16 %v393
    %v597 = vunpack.c.l.b16 %v394
    %v598 = vunpack.c.h.b16 %v394
    %v599 = vunpack.c.l.b16 %v395
    %v600 = vunpack.c.l.b16 %v396
    %v601 = vunpack.c.h.b16 %v396
    %v602 = vunpack.c.l.b16 %v397
    %v603 = vunpack.c.l.b16 %v398
    %v604 = vunpack.c.h.b16 %v398
    %v605 = vunpack.c.l.b16 %v399
    %v606 = vunpack.c.l.b16 %v400
    %v607 = vunpack.c.h.b16 %v400
    %v608 = vunpack.c.l.b16 %v401
    %v609 = vunpack.c.l.b16 %v402
    %v610 = vunpack.c.h.b16 %v402
    %v611 = vunpack.c.l.b16 %v403
    %v612 = vunpack.c.l.b16 %v404
    %v613 = vunpack.c.h.b16 %v404
    %v614 = vunpack.c.l.b16 %v405
    %v615 = vunpack.c.l.b16 %v406
    %v616 = vunpack.c.h.b16 %v406
    %v617 = vunpack.c.l.b16 %v407
    %v618 = vunpack.c.l.b16 %v408
    %v619 = vunpack.c.h.b16 %v408
    %v620 = vunpack.c.l.b16 %v409
    %v621 = vunpack.c.l.b16 %v410
    %v622 = vunpack.c.h.b16 %v410
    %v623 = vunpack.c.l.b16 %v411
    %v624 = vunpack.c.l.b16 %v412
    %v625 = vunpack.c.h.b16 %v412
    %v626 = vunpack.c.l.b16 %v413
    %v627 = vunpack.c.l.b16 %v414
    %v628 = vunpack.c.h.b16 %v414
    %v629 = vunpack.c.l.b16 %v415
    %v630 = vunpack.c.l.b16 %v416
    %v631 = vunpack.c.h.b16 %v416
    %v632 = vunpack.c.l.b16 %v417
    %v633 = vunpack.c.l.b16 %v418
    %v634 = vunpack.c.h.b16 %v418
    %v635 = vunpack.c.l.b16 %v419
    %v636 = vunpack.c.l.b16 %v420
    %v637 = vunpack.c.h.b16 %v420
    %v638 = vunpack.c.l.b16 %v421
    %v639 = vunpack.c.l.b16 %v422
    %v640 = vunpack.c.h.b16 %v422
    %v641 = vunpack.c.l.b16 %v423
    %v642 = vunpack.c.l.b16 %v424
    %v643 = vunpack.c.h.b16 %v424
    %v644 = vunpack.c.l.b16 %v425
    %v645 = vunpack.c.l.b16 %v426
    %v646 = vunpack.c.h.b16 %v426
    %v647 = vunpack.c.l.b16 %v427
    %v648 = vunpack.c.l.b16 %v428
    %v649 = vunpack.c.h.b16 %v428
    %v650 = vunpack.c.l.b16 %v429
    %v651 = vunpack.c.l.b16 %v430
    %v652 = vunpack.c.h.b16 %v430
    %v653 = vunpack.c.l.b16 %v431
    %v654 = vunpack.c.l.b16 %v432
    %v655 = vunpack.c.h.b16 %v432
    %v656 = vunpack.c.l.b16 %v433
    %v657 = vunpack.c.l.b16 %v434
    %v658 = vunpack.c.h.b16 %v434
    %v659 = vunpack.c.l.b16 %v435
    %v660 = vunpack.c.l.b16 %v436
    %v661 = vunpack.c.h.b16 %v436
    %v662 = vunpack.c.l.b16 %v437
    %v663 = vunpack.c.l.b16 %v438
    %v664 = vunpack.c.h.b16 %v438
    %v665 = vunpack.c.l.b16 %v439
    %v666 = vunpack.c.l.b16 %v440
    %v667 = vunpack.c.h.b16 %v440
    %v668 = vunpack.c.l.b16 %v441
    %v669 = vunpack.c.l.b16 %v442
    %v670 = vunpack.c.h.b16 %v442
    %v671 = vunpack.c.l.b16 %v443
    %v672 = vunpack.c.l.b16 %v444
    %v673 = vunpack.c.h.b16 %v444
    %v674 = vunpack.c.l.b16 %v445
    %v675 = vunpack.c.l.b16 %v446
    %v676 = vunpack.c.h.b16 %v446
    %v677 = vunpack.c.l.b16 %v447
    %v678 = vunpack.c.l.b16 %v448
    %v679 = vunpack.c.h.b16 %v448
    %v680 = vunpack.c.l.b16 %v449
    %v681 = vunpack.c.l.b16 %v450
    %v682 = vunpack.c.h.b16 %v450
    %v683 = vunpack.c.l.b16 %v451
    %v684 = vunpack.c.l.b16 %v452
    %v685 = vunpack.c.h.b16 %v452
    %v686 = vunpack.c.l.b16 %v453
    %v687 = vunpack.c.l.b16 %v454
    %v688 = vunpack.c.h.b16 %v454
    %v689 = vunpack.c.l.b16 %v455
    %v690 = vunpack.c.l.b16 %v456
    %v691 = vunpack.c.h.b16 %v456
    %v692 = vunpack.c.l.b16 %v457
    %v693 = vunpack.c.l.b16 %v458
    %v694 = vunpack.c.h.b16 %v458
    %v695 = vunpack.c.l.b16 %v459
    %v696 = vunpack.c.l.b16 %v460
    %v697 = vunpack.c.h.b16 %v460
    %v698 = vunpack.c.l.b16 %v461
    %v699 = vunpack.c.l.b16 %v462
    %v700 = vunpack.c.h.b16 %v462
    %v701 = vunpack.c.l.b16 %v463
    %v702 = vunpack.c.l.b16 %v464
    %v703 = vunpack.c.h.b16 %v464
    %v704 = vunpack.c.l.b16 %v465
    %v705 = vunpack.c.l.b16 %v466
    %v706 = vunpack.c.h.b16 %v466
    %v707 = vunpack.c.l.b16 %v467
    %v708 = vpack.c.b16 %v567, %v564
    %v709 = vpack.c.b16 %v568, %v565
    %v710 = vpack.c.b16 %v569, %v566
    %v711 = vpack.c.b16 %v573, %v570
    %v712 = vpack.c.b16 %v574, %v571
    %v713 = vpack.c.b16 %v575, %v572
    %v714 = vpack.c.b16 %v579, %v576
    %v715 = vpack.c.b16 %v580, %v577
    %v716 = vpack.c.b16 %v581, %v578
    %v717 = vpack.c.b16 %v585, %v582
    %v718 = vpack.c.b16 %v586, %v583
    %v719 = vpack.c.b16 %v587, %v584
    %v720 = vpack.c.b16 %v591, %v588
    %v721 = vpack.c.b16 %v592, %v589
    %v722 = vpack.c.b16 %v593, %v590
    %v723 = vpack.c.b16 %v597, %v594
    %v724 = vpack.c.b16 %v598, %v595
    %v725 = vpack.c.b16 %v599, %v596
    %v726 = vpack.c.b16 %v603, %v600
    %v727 = vpack.c.b16 %v604, %v601
    %v728 = vpack.c.b16 %v605, %v602
    %v729 = vpack.c.b16 %v609, %v606
    %v730 = vpack.c.b16 %v610, %v607
    %v731 = vpack.c.b16 %v611, %v608
    %v732 = vpack.c.b16 %v615, %v612
    %v733 = vpack.c.b16 %v616, %v613
    %v734 = vpack.c.b16 %v617, %v614
    %v735 = vpack.c.b16 %v621, %v618
    %v736 = vpack.c.b16 %v622, %v619
    %v737 = vpack.c.b16 %v623, %v620
    %v738 = vpack.c.b16 %v627, %v624
    %v739 = vpack.c.b16 %v628, %v625
    %v740 = vpack.c.b16 %v629, %v626
    %v741 = vpack.c.b16 %v633, %v630
    %v742 = vpack.c.b16 %v634, %v631
    %v743 = vpack.c.b16 %v635, %v632
    %v744 = vpack.c.b16 %v639, %v636
    %v745 = vpack.c.b16 %v640, %v637
    %v746 = vpack.c.b16 %v641, %v638
    %v747 = vpack.c.b16 %v645, %v642
    %v748 = vpack.c.b16 %v646, %v643
    %v749 = vpack.c.b16 %v647, %v644
    %v750 = vpack.c.b16 %v651, %v648
    %v751 = vpack.c.b16 %v652, %v649
    %v752 = vpack.c.b16 %v653, %v650
    %v753 = vpack.c.b16 %v657, %v654
    %v754 = vpack.c.b16 %v658, %v655
    %v755 = vpack.c.b16 %v659, %v656
    %v756 = vpack.c.b16 %v663, %v660
    %v757 = vpack.c.b16 %v664, %v661
    %v758 = vpack.c.b16 %v665, %v662
    %v759 = vpack.c.b16 %v669, %v666
    %v760 = vpack.c.b16 %v670, %v667
    %v761 = vpack.c.b16 %v671, %v668
    %v762 = vpack.c.b16 %v675, %v672
    %v763 = vpack.c.b16 %v676, %v673
    %v764 = vpack.c.b16 %v677, %v674
    %v765 = vpack.c.b16 %v681, %v678
    %v766 = vpack.c.b16 %v682, %v679
    %v767 = vpack.c.b16 %v683, %v680
    %v768 = vpack.c.b16 %v687, %v684
    %v769 = vpack.c.b16 %v688, %v685
    %v770 = vpack.c.b16 %v689, %v686
    %v771 = vpack.c.b16 %v693, %v690
    %v772 = vpack.c.b16 %v694, %v691
    %v773 = vpack.c.b16 %v695, %v692
    %v774 = vpack.c.b16 %v699, %v696
    %v775 = vpack.c.b16 %v700, %v697
    %v776 = vpack.c.b16 %v701, %v698
    %v777 = vpack.c.b16 %v705, %v702
    %v778 = vpack.c.b16 %v706, %v703
    %v779 = vpack.c.b16 %v707, %v704
    %852 = vmatprep.subr.bf16.mxu0 %v709
    %853 = vmatpush1.bf16.msra.mxu0 %v708
    %854 = vmatprep.subr.bf16.mxu0 %v712
    %855 = vmatpush1.bf16.msra.mxu0 %v711
    %856 = vmatprep.subr.bf16.mxu0 %v715
    %857 = vmatpush1.bf16.msra.mxu0 %v714
    %858 = vmatprep.subr.bf16.mxu0 %v718
    %859 = vmatpush1.bf16.msra.mxu0 %v717
    %860 = vmatprep.subr.bf16.mxu0 %v721
    %861 = vmatpush1.bf16.msra.mxu0 %v720
    %862 = vmatprep.subr.bf16.mxu0 %v724
    %863 = vmatpush1.bf16.msra.mxu0 %v723
    %864 = vmatprep.subr.bf16.mxu0 %v727
    %865 = vmatpush1.bf16.msra.mxu0 %v726
    %866 = vmatprep.subr.bf16.mxu0 %v730
    %867 = vmatpush1.bf16.msra.mxu0 %v729
    %868 = vmatprep.subr.bf16.mxu0 %v733
    %869 = vmatpush1.bf16.msra.mxu0 %v732
    %870 = vmatprep.subr.bf16.mxu0 %v736
    %871 = vmatpush1.bf16.msra.mxu0 %v735
    %872 = vmatprep.subr.bf16.mxu0 %v739
    %873 = vmatpush1.bf16.msra.mxu0 %v738
    %874 = vmatprep.subr.bf16.mxu0 %v742
    %875 = vmatpush1.bf16.msra.mxu0 %v741
    %876 = vmatprep.subr.bf16.mxu0 %v745
    %877 = vmatpush1.bf16.msra.mxu0 %v744
    %878 = vmatprep.subr.bf16.mxu0 %v748
    %879 = vmatpush1.bf16.msra.mxu0 %v747
    %880 = vmatprep.subr.bf16.mxu0 %v751
    %881 = vmatpush1.bf16.msra.mxu0 %v750
    %882 = vmatprep.subr.bf16.mxu0 %v754
    %883 = vmatpush1.bf16.msra.mxu0 %v753
    %884 = vmatprep.mubr.bf16.mxu0 %v370
    %885 = vmatmul.mubr.bf16.gmra.mrb[0].mxu0 %v369
    %v886 = vpop.f32.mrb[0].mxu0
    %v887 = vadd.f32 0.0, %v886
    %v888 = vpop.f32.mrb[0].mxu0
    %v889 = vadd.f32 0.0, %v888
    %v890 = vpop.f32.mrb[0].mxu0
    %v891 = vpop.f32.mrb[0].mxu0
    %892 = vdwg.mxu0
    %893 = vmatprep.subr.bf16.mxu0 %v757
    %894 = vmatpush1.bf16.msra.mxu0 %v756
    %895 = vmatprep.subr.bf16.mxu0 %v760
    %896 = vmatpush1.bf16.msra.mxu0 %v759
    %897 = vmatprep.subr.bf16.mxu0 %v763
    %898 = vmatpush1.bf16.msra.mxu0 %v762
    %899 = vmatprep.subr.bf16.mxu0 %v766
    %900 = vmatpush1.bf16.msra.mxu0 %v765
    %901 = vmatprep.subr.bf16.mxu0 %v769
    %902 = vmatpush1.bf16.msra.mxu0 %v768
    %903 = vmatprep.subr.bf16.mxu0 %v772
    %904 = vmatpush1.bf16.msra.mxu0 %v771
    %905 = vmatprep.subr.bf16.mxu0 %v775
    %906 = vmatpush1.bf16.msra.mxu0 %v774
    %907 = vmatprep.subr.bf16.mxu0 %v778
    %908 = vmatpush1.bf16.msra.mxu0 %v777
    %909 = vmatprep.subr.bf16.mxu0 0
    %910 = vmatpush1.bf16.msra.mxu0 0
    %911 = vmatprep.subr.bf16.mxu0 0
    %912 = vmatpush1.bf16.msra.mxu0 0
    %913 = vmatprep.subr.bf16.mxu0 0
    %914 = vmatpush1.bf16.msra.mxu0 0
    %915 = vmatprep.subr.bf16.mxu0 0
    %916 = vmatpush1.bf16.msra.mxu0 0
    %917 = vmatprep.subr.bf16.mxu0 0
    %918 = vmatpush1.bf16.msra.mxu0 0
    %919 = vmatprep.subr.bf16.mxu0 0
    %920 = vmatpush1.bf16.msra.mxu0 0
    %921 = vmatprep.subr.bf16.mxu0 0
    %922 = vmatpush1.bf16.msra.mxu0 0
    %923 = vmatprep.subr.bf16.mxu0 0
    %924 = vmatpush1.bf16.msra.mxu0 0
    %925 = vmatprep.mubr.bf16.mxu0 0
    %926 = vmatmul.mubr.bf16.gmra.mrb[0].mxu0 %v371
    %v927 = vpop.f32.mrb[0].mxu0
    %v928 = vadd.f32 %v887, %v927
    %v929 = vpop.f32.mrb[0].mxu0
    %v930 = vadd.f32 %v889, %v929
    %v931 = vpop.f32.mrb[0].mxu0
    %v932 = vpop.f32.mrb[0].mxu0
    %933 = vdwg.mxu0
    %934 = vmatprep.subr.bf16.mxu0 0
    %935 = vmatpush1.bf16.msra.mxu0 %v710
    %936 = vmatprep.subr.bf16.mxu0 0
    %937 = vmatpush1.bf16.msra.mxu0 %v713
    %938 = vmatprep.subr.bf16.mxu0 0
    %939 = vmatpush1.bf16.msra.mxu0 %v716
    %940 = vmatprep.subr.bf16.mxu0 0
    %941 = vmatpush1.bf16.msra.mxu0 %v719
    %942 = vmatprep.subr.bf16.mxu0 0
    %943 = vmatpush1.bf16.msra.mxu0 %v722
    %944 = vmatprep.subr.bf16.mxu0 0
    %945 = vmatpush1.bf16.msra.mxu0 %v725
    %946 = vmatprep.subr.bf16.mxu0 0
    %947 = vmatpush1.bf16.msra.mxu0 %v728
    %948 = vmatprep.subr.bf16.mxu0 0
    %949 = vmatpush1.bf16.msra.mxu0 %v731
    %950 = vmatprep.subr.bf16.mxu0 0
    %951 = vmatpush1.bf16.msra.mxu0 %v734
    %952 = vmatprep.subr.bf16.mxu0 0
    %953 = vmatpush1.bf16.msra.mxu0 %v737
    %954 = vmatprep.subr.bf16.mxu0 0
    %955 = vmatpush1.bf16.msra.mxu0 %v740
    %956 = vmatprep.subr.bf16.mxu0 0
    %957 = vmatpush1.bf16.msra.mxu0 %v743
    %958 = vmatprep.subr.bf16.mxu0 0
    %959 = vmatpush1.bf16.msra.mxu0 %v746
    %960 = vmatprep.subr.bf16.mxu0 0
    %961 = vmatpush1.bf16.msra.mxu0 %v749
    %962 = vmatprep.subr.bf16.mxu0 0
    %963 = vmatpush1.bf16.msra.mxu0 %v752
    %964 = vmatprep.subr.bf16.mxu0 0
    %965 = vmatpush1.bf16.msra.mxu0 %v755
    %966 = vmatprep.mubr.bf16.mxu0 %v370
    %967 = vmatmul.mubr.bf16.gmra.mrb[0].mxu0 %v369
    %v968 = vpop.f32.mrb[0].mxu0
    %v969 = vadd.f32 0.0, %v968
    %v970 = vpop.f32.mrb[0].mxu0
    %v971 = vpop.f32.mrb[0].mxu0
    %v972 = vpop.f32.mrb[0].mxu0
    %973 = vdwg.mxu0
    %974 = vmatprep.subr.bf16.mxu0 0
    %975 = vmatpush1.bf16.msra.mxu0 %v758
    %976 = vmatprep.subr.bf16.mxu0 0
    %977 = vmatpush1.bf16.msra.mxu0 %v761
    %978 = vmatprep.subr.bf16.mxu0 0
    %979 = vmatpush1.bf16.msra.mxu0 %v764
    %980 = vmatprep.subr.bf16.mxu0 0
    %981 = vmatpush1.bf16.msra.mxu0 %v767
    %982 = vmatprep.subr.bf16.mxu0 0
    %983 = vmatpush1.bf16.msra.mxu0 %v770
    %984 = vmatprep.subr.bf16.mxu0 0
    %985 = vmatpush1.bf16.msra.mxu0 %v773
    %986 = vmatprep.subr.bf16.mxu0 0
    %987 = vmatpush1.bf16.msra.mxu0 %v776
    %988 = vmatprep.subr.bf16.mxu0 0
    %989 = vmatpush1.bf16.msra.mxu0 %v779
    %990 = vmatprep.subr.bf16.mxu0 0
    %991 = vmatpush1.bf16.msra.mxu0 0
    %992 = vmatprep.subr.bf16.mxu0 0
    %993 = vmatpush1.bf16.msra.mxu0 0
    %994 = vmatprep.subr.bf16.mxu0 0
    %995 = vmatpush1.bf16.msra.mxu0 0
    %996 = vmatprep.subr.bf16.mxu0 0
    %997 = vmatpush1.bf16.msra.mxu0 0
    %998 = vmatprep.subr.bf16.mxu0 0
    %999 = vmatpush1.bf16.msra.mxu0 0
    %1000 = vmatprep.subr.bf16.mxu0 0
    %1001 = vmatpush1.bf16.msra.mxu0 0
    %1002 = vmatprep.subr.bf16.mxu0 0
    %1003 = vmatpush1.bf16.msra.mxu0 0
    %1004 = vmatprep.subr.bf16.mxu0 0
    %1005 = vmatpush1.bf16.msra.mxu0 0
    %1006 = vmatprep.mubr.bf16.mxu0 0
    %1007 = vmatmul.mubr.bf16.gmra.mrb[0].mxu0 %v371
    %v1008 = vpop.f32.mrb[0].mxu0
    %v1009 = vadd.f32 %v969, %v1008
    %v1010 = vpop.f32.mrb[0].mxu0
    %v1011 = vpop.f32.mrb[0].mxu0
    %v1012 = vpop.f32.mrb[0].mxu0
    %1013 = vdwg.mxu0
    %v1014 = vrot.slane %v928, 4
    %v1015 = vadd.f32 %v928, %v1014
    %v1016 = vrot.slane %v1015, 2
    %v1017 = vadd.f32 %v1015, %v1016
    %v1018 = vrot.slane %v1017, 1
    %v1019 = vadd.f32 %v1017, %v1018
    %v1020 = vrot.slane %v930, 4
    %v1021 = vadd.f32 %v930, %v1020
    %v1022 = vrot.slane %v1021, 2
    %v1023 = vadd.f32 %v1021, %v1022
    %v1024 = vrot.slane %v1023, 1
    %v1025 = vadd.f32 %v1023, %v1024
    %v1026 = vrot.slane %v1009, 4
    %v1027 = vadd.f32 %v1009, %v1026
    %v1028 = vrot.slane %v1027, 2
    %v1029 = vadd.f32 %v1027, %v1028
    %v1030 = vrot.slane %v1029, 1
    %v1031 = vadd.f32 %v1029, %v1030
    %v1032 = vmul.f32 %v928, %v928
    %v1033 = vmul.f32 %v930, %v930
    %v1034 = vmul.f32 %v1009, %v1009
    %v1035 = vrot.slane %v1032, 4
    %v1036 = vadd.f32 %v1032, %v1035
    %v1037 = vrot.slane %v1036, 2
    %v1038 = vadd.f32 %v1036, %v1037
    %v1039 = vrot.slane %v1038, 1
    %v1040 = vadd.f32 %v1038, %v1039
    %v1041 = vrot.slane %v1033, 4
    %v1042 = vadd.f32 %v1033, %v1041
    %v1043 = vrot.slane %v1042, 2
    %v1044 = vadd.f32 %v1042, %v1043
    %v1045 = vrot.slane %v1044, 1
    %v1046 = vadd.f32 %v1044, %v1045
    %v1047 = vrot.slane %v1034, 4
    %v1048 = vadd.f32 %v1034, %v1047
    %v1049 = vrot.slane %v1048, 2
    %v1050 = vadd.f32 %v1048, %v1049
    %v1051 = vrot.slane %v1050, 1
    %v1052 = vadd.f32 %v1050, %v1051
    %v1053 = vmul.f32 %v1019, 0.125
    %v1054 = vmul.f32 %v1025, 0.125
    %v1055 = vmul.f32 %v1031, 0.125
    %v1056 = vmul.f32 %v1040, 0.125
    %v1057 = vmul.f32 %v1046, 0.125
    %v1058 = vmul.f32 %v1052, 0.125
    %v1059 = vmul.f32 %v1053, %v1053
    %v1060 = vmul.f32 %v1054, %v1054
    %v1061 = vmul.f32 %v1055, %v1055
    %v1062 = vsub.f32 %v1056, %v1059
    %v1063 = vsub.f32 %v1057, %v1060
    %v1064 = vsub.f32 %v1058, %v1061
    %v1065 = vsub.f32 %v928, %v1053
    %v1066 = vsub.f32 %v930, %v1054
    %v1067 = vsub.f32 %v1009, %v1055
    %v1068 = vadd.f32 %v1062, 1e-05
    %v1069 = vadd.f32 %v1063, 1e-05
    %v1070 = vadd.f32 %v1064, 1e-05
    %v1071 = vrsqrt.pop %v1068
    %v1072 = vrsqrt.pop %v1069
    %v1073 = vrsqrt.pop %v1070
    %v1074 = vmul.f32 %v1065, %v1071
    %v1075 = vmul.f32 %v1066, %v1072
    %v1076 = vmul.f32 %v1067, %v1073
    %v1078 = vlaneseq
    %v1079 = vshrl.u32 %v1078, 7
    %v1080 = vsub.s32 0, %v1079
    %v1081 = vrot.slane %v105, %v1080
    %v1082 = vlaneseq
    %v1083 = vshrl.u32 %v1082, 7
    %v1084 = vsub.s32 1, %v1083
    %v1085 = vrot.slane %v105, %v1084
    %v1086 = vlaneseq
    %v1087 = vshrl.u32 %v1086, 7
    %v1088 = vsub.s32 2, %v1087
    %v1089 = vrot.slane %v105, %v1088
    %v1093 = vmul.f32 %v1074, %v1081
    %v1094 = vmul.f32 %v1075, %v1085
    %v1095 = vmul.f32 %v1076, %v1089
    %v1097 = vlaneseq
    %v1098 = vshrl.u32 %v1097, 7
    %v1099 = vsub.s32 0, %v1098
    %v1100 = vrot.slane %v111, %v1099
    %v1101 = vlaneseq
    %v1102 = vshrl.u32 %v1101, 7
    %v1103 = vsub.s32 1, %v1102
    %v1104 = vrot.slane %v111, %v1103
    %v1105 = vlaneseq
    %v1106 = vshrl.u32 %v1105, 7
    %v1107 = vsub.s32 2, %v1106
    %v1108 = vrot.slane %v111, %v1107
    %v1112 = vadd.f32 %v1093, %v1100
    %v1113 = vadd.f32 %v1094, %v1104
    %v1114 = vadd.f32 %v1095, %v1108
    %v1115 = vmax.f32 %v1112, 0.0
    %v1116 = vmax.f32 %v1113, 0.0
    %v1117 = vmax.f32 %v1114, 0.0
    %v1118 = vpack.c.bf16 %v1115, %v1115
    %v1119 = vpack.c.bf16 %v1116, %v1116
    %v1120 = vpack.c.bf16 %v1117, %v1117
    %v1121 = vld [vmem:[#allocation8] sm:$0xff]
    %v1122 = vld [vmem:[#allocation8 + $0x8] sm:$0xf]
    %v1123 = vld [vmem:[#allocation8 + $0xc] sm:$0xff]
    %v1124 = vld [vmem:[#allocation8 + $0x14] sm:$0xf]
    %v1125 = vld [vmem:[#allocation8 + $0x18] sm:$0xff]
    %v1126 = vld [vmem:[#allocation8 + $0x20] sm:$0xf]
    %v1127 = vld [vmem:[#allocation8 + $0x24] sm:$0xff]
    %v1128 = vld [vmem:[#allocation8 + $0x2c] sm:$0xf]
    %v1129 = vld [vmem:[#allocation8 + $0x30] sm:$0xff]
    %v1130 = vld [vmem:[#allocation8 + $0x38] sm:$0xf]
    %v1131 = vld [vmem:[#allocation8 + $0x3c] sm:$0xff]
    %v1132 = vld [vmem:[#allocation8 + $0x44] sm:$0xf]
    %v1133 = vld [vmem:[#allocation8 + $0x48] sm:$0xff]
    %v1134 = vld [vmem:[#allocation8 + $0x50] sm:$0xf]
    %v1135 = vld [vmem:[#allocation8 + $0x54] sm:$0xff]
    %v1136 = vld [vmem:[#allocation8 + $0x5c] sm:$0xf]
    %v1137 = vld [vmem:[#allocation8 + $0x60] sm:$0xff]
    %v1138 = vld [vmem:[#allocation8 + $0x68] sm:$0xf]
    %v1139 = vld [vmem:[#allocation8 + $0x6c] sm:$0xff]
    %v1140 = vld [vmem:[#allocation8 + $0x74] sm:$0xf]
    %v1141 = vld [vmem:[#allocation8 + $0x78] sm:$0xff]
    %v1142 = vld [vmem:[#allocation8 + $0x80] sm:$0xf]
    %v1143 = vld [vmem:[#allocation8 + $0x84] sm:$0xff]
    %v1144 = vld [vmem:[#allocation8 + $0x8c] sm:$0xf]
    %v1145 = vld [vmem:[#allocation8 + $0x90] sm:$0xff]
    %v1146 = vld [vmem:[#allocation8 + $0x98] sm:$0xf]
    %v1147 = vld [vmem:[#allocation8 + $0x9c] sm:$0xff]
    %v1148 = vld [vmem:[#allocation8 + $0xa4] sm:$0xf]
    %v1149 = vld [vmem:[#allocation8 + $0xa8] sm:$0xff]
    %v1150 = vld [vmem:[#allocation8 + $0xb0] sm:$0xf]
    %v1151 = vld [vmem:[#allocation8 + $0xb4] sm:$0xff]
    %v1152 = vld [vmem:[#allocation8 + $0xbc] sm:$0xf]
    %v1153 = vld [vmem:[#allocation8 + $0xc0] sm:$0xff]
    %v1154 = vld [vmem:[#allocation8 + $0xc8] sm:$0xf]
    %v1155 = vld [vmem:[#allocation8 + $0xcc] sm:$0xff]
    %v1156 = vld [vmem:[#allocation8 + $0xd4] sm:$0xf]
    %v1157 = vld [vmem:[#allocation8 + $0xd8] sm:$0xff]
    %v1158 = vld [vmem:[#allocation8 + $0xe0] sm:$0xf]
    %v1159 = vld [vmem:[#allocation8 + $0xe4] sm:$0xff]
    %v1160 = vld [vmem:[#allocation8 + $0xec] sm:$0xf]
    %v1161 = vld [vmem:[#allocation8 + $0xf0] sm:$0xff]
    %v1162 = vld [vmem:[#allocation8 + $0xf8] sm:$0xf]
    %v1163 = vld [vmem:[#allocation8 + $0xfc] sm:$0xff]
    %v1164 = vld [vmem:[#allocation8 + $0x104] sm:$0xf]
    %v1165 = vld [vmem:[#allocation8 + $0x108] sm:$0xff]
    %v1166 = vld [vmem:[#allocation8 + $0x110] sm:$0xf]
    %v1167 = vld [vmem:[#allocation8 + $0x114] sm:$0xff]
    %v1168 = vld [vmem:[#allocation8 + $0x11c] sm:$0xf]
    %v1169 = vld [vmem:[#allocation8 + $0x120] sm:$0xff]
    %v1170 = vld [vmem:[#allocation8 + $0x128] sm:$0xf]
    %v1171 = vld [vmem:[#allocation8 + $0x12c] sm:$0xff]
    %v1172 = vld [vmem:[#allocation8 + $0x134] sm:$0xf]
    %v1173 = vld [vmem:[#allocation8 + $0x138] sm:$0xff]
    %v1174 = vld [vmem:[#allocation8 + $0x140] sm:$0xf]
    %v1175 = vld [vmem:[#allocation8 + $0x144] sm:$0xff]
    %v1176 = vld [vmem:[#allocation8 + $0x14c] sm:$0xf]
    %v1177 = vld [vmem:[#allocation8 + $0x150] sm:$0xff]
    %v1178 = vld [vmem:[#allocation8 + $0x158] sm:$0xf]
    %v1179 = vld [vmem:[#allocation8 + $0x15c] sm:$0xff]
    %v1180 = vld [vmem:[#allocation8 + $0x164] sm:$0xf]
    %v1181 = vld [vmem:[#allocation8 + $0x168] sm:$0xff]
    %v1182 = vld [vmem:[#allocation8 + $0x170] sm:$0xf]
    %v1183 = vld [vmem:[#allocation8 + $0x174] sm:$0xff]
    %v1184 = vld [vmem:[#allocation8 + $0x17c] sm:$0xf]
    %v1185 = vld [vmem:[#allocation8 + $0x180] sm:$0xff]
    %v1186 = vld [vmem:[#allocation8 + $0x188] sm:$0xf]
    %v1187 = vld [vmem:[#allocation8 + $0x18c] sm:$0xff]
    %v1188 = vld [vmem:[#allocation8 + $0x194] sm:$0xf]
    %v1189 = vld [vmem:[#allocation8 + $0x198] sm:$0xff]
    %v1190 = vld [vmem:[#allocation8 + $0x1a0] sm:$0xf]
    %v1191 = vld [vmem:[#allocation8 + $0x1a4] sm:$0xff]
    %v1192 = vld [vmem:[#allocation8 + $0x1ac] sm:$0xf]
    %v1193 = vld [vmem:[#allocation8 + $0x1b0] sm:$0xff]
    %v1194 = vld [vmem:[#allocation8 + $0x1b8] sm:$0xf]
    %v1195 = vld [vmem:[#allocation8 + $0x1bc] sm:$0xff]
    %v1196 = vld [vmem:[#allocation8 + $0x1c4] sm:$0xf]
    %v1197 = vld [vmem:[#allocation8 + $0x1c8] sm:$0xff]
    %v1198 = vld [vmem:[#allocation8 + $0x1d0] sm:$0xf]
    %v1199 = vld [vmem:[#allocation8 + $0x1d4] sm:$0xff]
    %v1200 = vld [vmem:[#allocation8 + $0x1dc] sm:$0xf]
    %v1201 = vld [vmem:[#allocation8 + $0x1e0] sm:$0xff]
    %v1202 = vld [vmem:[#allocation8 + $0x1e8] sm:$0xf]
    %v1203 = vld [vmem:[#allocation8 + $0x1ec] sm:$0xff]
    %v1204 = vld [vmem:[#allocation8 + $0x1f4] sm:$0xf]
    %v1205 = vld [vmem:[#allocation8 + $0x1f8] sm:$0xff]
    %v1206 = vld [vmem:[#allocation8 + $0x200] sm:$0xf]
    %v1207 = vld [vmem:[#allocation8 + $0x204] sm:$0xff]
    %v1208 = vld [vmem:[#allocation8 + $0x20c] sm:$0xf]
    %v1209 = vld [vmem:[#allocation8 + $0x210] sm:$0xff]
    %v1210 = vld [vmem:[#allocation8 + $0x218] sm:$0xf]
    %v1211 = vld [vmem:[#allocation8 + $0x21c] sm:$0xff]
    %v1212 = vld [vmem:[#allocation8 + $0x224] sm:$0xf]
    %v1213 = vld [vmem:[#allocation8 + $0x228] sm:$0xff]
    %v1214 = vld [vmem:[#allocation8 + $0x230] sm:$0xf]
    %v1215 = vld [vmem:[#allocation8 + $0x234] sm:$0xff]
    %v1216 = vld [vmem:[#allocation8 + $0x23c] sm:$0xf]
    %v1313 = vunpack.c.l.b16 %v1121
    %v1314 = vunpack.c.h.b16 %v1121
    %v1315 = vunpack.c.l.b16 %v1122
    %v1316 = vunpack.c.l.b16 %v1123
    %v1317 = vunpack.c.h.b16 %v1123
    %v1318 = vunpack.c.l.b16 %v1124
    %v1319 = vunpack.c.l.b16 %v1125
    %v1320 = vunpack.c.h.b16 %v1125
    %v1321 = vunpack.c.l.b16 %v1126
    %v1322 = vunpack.c.l.b16 %v1127
    %v1323 = vunpack.c.h.b16 %v1127
    %v1324 = vunpack.c.l.b16 %v1128
    %v1325 = vunpack.c.l.b16 %v1129
    %v1326 = vunpack.c.h.b16 %v1129
    %v1327 = vunpack.c.l.b16 %v1130
    %v1328 = vunpack.c.l.b16 %v1131
    %v1329 = vunpack.c.h.b16 %v1131
    %v1330 = vunpack.c.l.b16 %v1132
    %v1331 = vunpack.c.l.b16 %v1133
    %v1332 = vunpack.c.h.b16 %v1133
    %v1333 = vunpack.c.l.b16 %v1134
    %v1334 = vunpack.c.l.b16 %v1135
    %v1335 = vunpack.c.h.b16 %v1135
    %v1336 = vunpack.c.l.b16 %v1136
    %v1337 = vunpack.c.l.b16 %v1137
    %v1338 = vunpack.c.h.b16 %v1137
    %v1339 = vunpack.c.l.b16 %v1138
    %v1340 = vunpack.c.l.b16 %v1139
    %v1341 = vunpack.c.h.b16 %v1139
    %v1342 = vunpack.c.l.b16 %v1140
    %v1343 = vunpack.c.l.b16 %v1141
    %v1344 = vunpack.c.h.b16 %v1141
    %v1345 = vunpack.c.l.b16 %v1142
    %v1346 = vunpack.c.l.b16 %v1143
    %v1347 = vunpack.c.h.b16 %v1143
    %v1348 = vunpack.c.l.b16 %v1144
    %v1349 = vunpack.c.l.b16 %v1145
    %v1350 = vunpack.c.h.b16 %v1145
    %v1351 = vunpack.c.l.b16 %v1146
    %v1352 = vunpack.c.l.b16 %v1147
    %v1353 = vunpack.c.h.b16 %v1147
    %v1354 = vunpack.c.l.b16 %v1148
    %v1355 = vunpack.c.l.b16 %v1149
    %v1356 = vunpack.c.h.b16 %v1149
    %v1357 = vunpack.c.l.b16 %v1150
    %v1358 = vunpack.c.l.b16 %v1151
    %v1359 = vunpack.c.h.b16 %v1151
    %v1360 = vunpack.c.l.b16 %v1152
    %v1361 = vunpack.c.l.b16 %v1153
    %v1362 = vunpack.c.h.b16 %v1153
    %v1363 = vunpack.c.l.b16 %v1154
    %v1364 = vunpack.c.l.b16 %v1155
    %v1365 = vunpack.c.h.b16 %v1155
    %v1366 = vunpack.c.l.b16 %v1156
    %v1367 = vunpack.c.l.b16 %v1157
    %v1368 = vunpack.c.h.b16 %v1157
    %v1369 = vunpack.c.l.b16 %v1158
    %v1370 = vunpack.c.l.b16 %v1159
    %v1371 = vunpack.c.h.b16 %v1159
    %v1372 = vunpack.c.l.b16 %v1160
    %v1373 = vunpack.c.l.b16 %v1161
    %v1374 = vunpack.c.h.b16 %v1161
    %v1375 = vunpack.c.l.b16 %v1162
    %v1376 = vunpack.c.l.b16 %v1163
    %v1377 = vunpack.c.h.b16 %v1163
    %v1378 = vunpack.c.l.b16 %v1164
    %v1379 = vunpack.c.l.b16 %v1165
    %v1380 = vunpack.c.h.b16 %v1165
    %v1381 = vunpack.c.l.b16 %v1166
    %v1382 = vunpack.c.l.b16 %v1167
    %v1383 = vunpack.c.h.b16 %v1167
    %v1384 = vunpack.c.l.b16 %v1168
    %v1385 = vunpack.c.l.b16 %v1169
    %v1386 = vunpack.c.h.b16 %v1169
    %v1387 = vunpack.c.l.b16 %v1170
    %v1388 = vunpack.c.l.b16 %v1171
    %v1389 = vunpack.c.h.b16 %v1171
    %v1390 = vunpack.c.l.b16 %v1172
    %v1391 = vunpack.c.l.b16 %v1173
    %v1392 = vunpack.c.h.b16 %v1173
    %v1393 = vunpack.c.l.b16 %v1174
    %v1394 = vunpack.c.l.b16 %v1175
    %v1395 = vunpack.c.h.b16 %v1175
    %v1396 = vunpack.c.l.b16 %v1176
    %v1397 = vunpack.c.l.b16 %v1177
    %v1398 = vunpack.c.h.b16 %v1177
    %v1399 = vunpack.c.l.b16 %v1178
    %v1400 = vunpack.c.l.b16 %v1179
    %v1401 = vunpack.c.h.b16 %v1179
    %v1402 = vunpack.c.l.b16 %v1180
    %v1403 = vunpack.c.l.b16 %v1181
    %v1404 = vunpack.c.h.b16 %v1181
    %v1405 = vunpack.c.l.b16 %v1182
    %v1406 = vunpack.c.l.b16 %v1183
    %v1407 = vunpack.c.h.b16 %v1183
    %v1408 = vunpack.c.l.b16 %v1184
    %v1409 = vunpack.c.l.b16 %v1185
    %v1410 = vunpack.c.h.b16 %v1185
    %v1411 = vunpack.c.l.b16 %v1186
    %v1412 = vunpack.c.l.b16 %v1187
    %v1413 = vunpack.c.h.b16 %v1187
    %v1414 = vunpack.c.l.b16 %v1188
    %v1415 = vunpack.c.l.b16 %v1189
    %v1416 = vunpack.c.h.b16 %v1189
    %v1417 = vunpack.c.l.b16 %v1190
    %v1418 = vunpack.c.l.b16 %v1191
    %v1419 = vunpack.c.h.b16 %v1191
    %v1420 = vunpack.c.l.b16 %v1192
    %v1421 = vunpack.c.l.b16 %v1193
    %v1422 = vunpack.c.h.b16 %v1193
    %v1423 = vunpack.c.l.b16 %v1194
    %v1424 = vunpack.c.l.b16 %v1195
    %v1425 = vunpack.c.h.b16 %v1195
    %v1426 = vunpack.c.l.b16 %v1196
    %v1427 = vunpack.c.l.b16 %v1197
    %v1428 = vunpack.c.h.b16 %v1197
    %v1429 = vunpack.c.l.b16 %v1198
    %v1430 = vunpack.c.l.b16 %v1199
    %v1431 = vunpack.c.h.b16 %v1199
    %v1432 = vunpack.c.l.b16 %v1200
    %v1433 = vunpack.c.l.b16 %v1201
    %v1434 = vunpack.c.h.b16 %v1201
    %v1435 = vunpack.c.l.b16 %v1202
    %v1436 = vunpack.c.l.b16 %v1203
    %v1437 = vunpack.c.h.b16 %v1203
    %v1438 = vunpack.c.l.b16 %v1204
    %v1439 = vunpack.c.l.b16 %v1205
    %v1440 = vunpack.c.h.b16 %v1205
    %v1441 = vunpack.c.l.b16 %v1206
    %v1442 = vunpack.c.l.b16 %v1207
    %v1443 = vunpack.c.h.b16 %v1207
    %v1444 = vunpack.c.l.b16 %v1208
    %v1445 = vunpack.c.l.b16 %v1209
    %v1446 = vunpack.c.h.b16 %v1209
    %v1447 = vunpack.c.l.b16 %v1210
    %v1448 = vunpack.c.l.b16 %v1211
    %v1449 = vunpack.c.h.b16 %v1211
    %v1450 = vunpack.c.l.b16 %v1212
    %v1451 = vunpack.c.l.b16 %v1213
    %v1452 = vunpack.c.h.b16 %v1213
    %v1453 = vunpack.c.l.b16 %v1214
    %v1454 = vunpack.c.l.b16 %v1215
    %v1455 = vunpack.c.h.b16 %v1215
    %v1456 = vunpack.c.l.b16 %v1216
    %v1457 = vpack.c.b16 %v1316, %v1313
    %v1458 = vpack.c.b16 %v1317, %v1314
    %v1459 = vpack.c.b16 %v1318, %v1315
    %v1460 = vpack.c.b16 %v1322, %v1319
    %v1461 = vpack.c.b16 %v1323, %v1320
    %v1462 = vpack.c.b16 %v1324, %v1321
    %v1463 = vpack.c.b16 %v1328, %v1325
    %v1464 = vpack.c.b16 %v1329, %v1326
    %v1465 = vpack.c.b16 %v1330, %v1327
    %v1466 = vpack.c.b16 %v1334, %v1331
    %v1467 = vpack.c.b16 %v1335, %v1332
    %v1468 = vpack.c.b16 %v1336, %v1333
    %v1469 = vpack.c.b16 %v1340, %v1337
    %v1470 = vpack.c.b16 %v1341, %v1338
    %v1471 = vpack.c.b16 %v1342, %v1339
    %v1472 = vpack.c.b16 %v1346, %v1343
    %v1473 = vpack.c.b16 %v1347, %v1344
    %v1474 = vpack.c.b16 %v1348, %v1345
    %v1475 = vpack.c.b16 %v1352, %v1349
    %v1476 = vpack.c.b16 %v1353, %v1350
    %v1477 = vpack.c.b16 %v1354, %v1351
    %v1478 = vpack.c.b16 %v1358, %v1355
    %v1479 = vpack.c.b16 %v1359, %v1356
    %v1480 = vpack.c.b16 %v1360, %v1357
    %v1481 = vpack.c.b16 %v1364, %v1361
    %v1482 = vpack.c.b16 %v1365, %v1362
    %v1483 = vpack.c.b16 %v1366, %v1363
    %v1484 = vpack.c.b16 %v1370, %v1367
    %v1485 = vpack.c.b16 %v1371, %v1368
    %v1486 = vpack.c.b16 %v1372, %v1369
    %v1487 = vpack.c.b16 %v1376, %v1373
    %v1488 = vpack.c.b16 %v1377, %v1374
    %v1489 = vpack.c.b16 %v1378, %v1375
    %v1490 = vpack.c.b16 %v1382, %v1379
    %v1491 = vpack.c.b16 %v1383, %v1380
    %v1492 = vpack.c.b16 %v1384, %v1381
    %v1493 = vpack.c.b16 %v1388, %v1385
    %v1494 = vpack.c.b16 %v1389, %v1386
    %v1495 = vpack.c.b16 %v1390, %v1387
    %v1496 = vpack.c.b16 %v1394, %v1391
    %v1497 = vpack.c.b16 %v1395, %v1392
    %v1498 = vpack.c.b16 %v1396, %v1393
    %v1499 = vpack.c.b16 %v1400, %v1397
    %v1500 = vpack.c.b16 %v1401, %v1398
    %v1501 = vpack.c.b16 %v1402, %v1399
    %v1502 = vpack.c.b16 %v1406, %v1403
    %v1503 = vpack.c.b16 %v1407, %v1404
    %v1504 = vpack.c.b16 %v1408, %v1405
    %v1505 = vpack.c.b16 %v1412, %v1409
    %v1506 = vpack.c.b16 %v1413, %v1410
    %v1507 = vpack.c.b16 %v1414, %v1411
    %v1508 = vpack.c.b16 %v1418, %v1415
    %v1509 = vpack.c.b16 %v1419, %v1416
    %v1510 = vpack.c.b16 %v1420, %v1417
    %v1511 = vpack.c.b16 %v1424, %v1421
    %v1512 = vpack.c.b16 %v1425, %v1422
    %v1513 = vpack.c.b16 %v1426, %v1423
    %v1514 = vpack.c.b16 %v1430, %v1427
    %v1515 = vpack.c.b16 %v1431, %v1428
    %v1516 = vpack.c.b16 %v1432, %v1429
    %v1517 = vpack.c.b16 %v1436, %v1433
    %v1518 = vpack.c.b16 %v1437, %v1434
    %v1519 = vpack.c.b16 %v1438, %v1435
    %v1520 = vpack.c.b16 %v1442, %v1439
    %v1521 = vpack.c.b16 %v1443, %v1440
    %v1522 = vpack.c.b16 %v1444, %v1441
    %v1523 = vpack.c.b16 %v1448, %v1445
    %v1524 = vpack.c.b16 %v1449, %v1446
    %v1525 = vpack.c.b16 %v1450, %v1447
    %v1526 = vpack.c.b16 %v1454, %v1451
    %v1527 = vpack.c.b16 %v1455, %v1452
    %v1528 = vpack.c.b16 %v1456, %v1453
    %1601 = vmatprep.subr.bf16.mxu0 %v1458
    %1602 = vmatpush1.bf16.msra.mxu0 %v1457
    %1603 = vmatprep.subr.bf16.mxu0 %v1461
    %1604 = vmatpush1.bf16.msra.mxu0 %v1460
    %1605 = vmatprep.subr.bf16.mxu0 %v1464
    %1606 = vmatpush1.bf16.msra.mxu0 %v1463
    %1607 = vmatprep.subr.bf16.mxu0 %v1467
    %1608 = vmatpush1.bf16.msra.mxu0 %v1466
    %1609 = vmatprep.subr.bf16.mxu0 %v1470
    %1610 = vmatpush1.bf16.msra.mxu0 %v1469
    %1611 = vmatprep.subr.bf16.mxu0 %v1473
    %1612 = vmatpush1.bf16.msra.mxu0 %v1472
    %1613 = vmatprep.subr.bf16.mxu0 %v1476
    %1614 = vmatpush1.bf16.msra.mxu0 %v1475
    %1615 = vmatprep.subr.bf16.mxu0 %v1479
    %1616 = vmatpush1.bf16.msra.mxu0 %v1478
    %1617 = vmatprep.subr.bf16.mxu0 %v1482
    %1618 = vmatpush1.bf16.msra.mxu0 %v1481
    %1619 = vmatprep.subr.bf16.mxu0 %v1485
    %1620 = vmatpush1.bf16.msra.mxu0 %v1484
    %1621 = vmatprep.subr.bf16.mxu0 %v1488
    %1622 = vmatpush1.bf16.msra.mxu0 %v1487
    %1623 = vmatprep.subr.bf16.mxu0 %v1491
    %1624 = vmatpush1.bf16.msra.mxu0 %v1490
    %1625 = vmatprep.subr.bf16.mxu0 %v1494
    %1626 = vmatpush1.bf16.msra.mxu0 %v1493
    %1627 = vmatprep.subr.bf16.mxu0 %v1497
    %1628 = vmatpush1.bf16.msra.mxu0 %v1496
    %1629 = vmatprep.subr.bf16.mxu0 %v1500
    %1630 = vmatpush1.bf16.msra.mxu0 %v1499
    %1631 = vmatprep.subr.bf16.mxu0 %v1503
    %1632 = vmatpush1.bf16.msra.mxu0 %v1502
    %1633 = vmatprep.mubr.bf16.mxu0 %v1119
    %1634 = vmatmul.mubr.bf16.gmra.mrb[0].mxu0 %v1118
    %v1635 = vpop.f32.mrb[0].mxu0
    %v1636 = vadd.f32 0.0, %v1635
    %v1637 = vpop.f32.mrb[0].mxu0
    %v1638 = vadd.f32 0.0, %v1637
    %v1639 = vpop.f32.mrb[0].mxu0
    %v1640 = vpop.f32.mrb[0].mxu0
    %1641 = vdwg.mxu0
    %1642 = vmatprep.subr.bf16.mxu0 %v1506
    %1643 = vmatpush1.bf16.msra.mxu0 %v1505
    %1644 = vmatprep.subr.bf16.mxu0 %v1509
    %1645 = vmatpush1.bf16.msra.mxu0 %v1508
    %1646 = vmatprep.subr.bf16.mxu0 %v1512
    %1647 = vmatpush1.bf16.msra.mxu0 %v1511
    %1648 = vmatprep.subr.bf16.mxu0 %v1515
    %1649 = vmatpush1.bf16.msra.mxu0 %v1514
    %1650 = vmatprep.subr.bf16.mxu0 %v1518
    %1651 = vmatpush1.bf16.msra.mxu0 %v1517
    %1652 = vmatprep.subr.bf16.mxu0 %v1521
    %1653 = vmatpush1.bf16.msra.mxu0 %v1520
    %1654 = vmatprep.subr.bf16.mxu0 %v1524
    %1655 = vmatpush1.bf16.msra.mxu0 %v1523
    %1656 = vmatprep.subr.bf16.mxu0 %v1527
    %1657 = vmatpush1.bf16.msra.mxu0 %v1526
    %1658 = vmatprep.subr.bf16.mxu0 0
    %1659 = vmatpush1.bf16.msra.mxu0 0
    %1660 = vmatprep.subr.bf16.mxu0 0
    %1661 = vmatpush1.bf16.msra.mxu0 0
    %1662 = vmatprep.subr.bf16.mxu0 0
    %1663 = vmatpush1.bf16.msra.mxu0 0
    %1664 = vmatprep.subr.bf16.mxu0 0
    %1665 = vmatpush1.bf16.msra.mxu0 0
    %1666 = vmatprep.subr.bf16.mxu0 0
    %1667 = vmatpush1.bf16.msra.mxu0 0
    %1668 = vmatprep.subr.bf16.mxu0 0
    %1669 = vmatpush1.bf16.msra.mxu0 0
    %1670 = vmatprep.subr.bf16.mxu0 0
    %1671 = vmatpush1.bf16.msra.mxu0 0
    %1672 = vmatprep.subr.bf16.mxu0 0
    %1673 = vmatpush1.bf16.msra.mxu0 0
    %1674 = vmatprep.mubr.bf16.mxu0 0
    %1675 = vmatmul.mubr.bf16.gmra.mrb[0].mxu0 %v1120
    %v1676 = vpop.f32.mrb[0].mxu0
    %v1677 = vadd.f32 %v1636, %v1676
    %v1678 = vpop.f32.mrb[0].mxu0
    %v1679 = vadd.f32 %v1638, %v1678
    %v1680 = vpop.f32.mrb[0].mxu0
    %v1681 = vpop.f32.mrb[0].mxu0
    %1682 = vdwg.mxu0
    %1683 = vmatprep.subr.bf16.mxu0 0
    %1684 = vmatpush1.bf16.msra.mxu0 %v1459
    %1685 = vmatprep.subr.bf16.mxu0 0
    %1686 = vmatpush1.bf16.msra.mxu0 %v1462
    %1687 = vmatprep.subr.bf16.mxu0 0
    %1688 = vmatpush1.bf16.msra.mxu0 %v1465
    %1689 = vmatprep.subr.bf16.mxu0 0
    %1690 = vmatpush1.bf16.msra.mxu0 %v1468
    %1691 = vmatprep.subr.bf16.mxu0 0
    %1692 = vmatpush1.bf16.msra.mxu0 %v1471
    %1693 = vmatprep.subr.bf16.mxu0 0
    %1694 = vmatpush1.bf16.msra.mxu0 %v1474
    %1695 = vmatprep.subr.bf16.mxu0 0
    %1696 = vmatpush1.bf16.msra.mxu0 %v1477
    %1697 = vmatprep.subr.bf16.mxu0 0
    %1698 = vmatpush1.bf16.msra.mxu0 %v1480
    %1699 = vmatprep.subr.bf16.mxu0 0
    %1700 = vmatpush1.bf16.msra.mxu0 %v1483
    %1701 = vmatprep.subr.bf16.mxu0 0
    %1702 = vmatpush1.bf16.msra.mxu0 %v1486
    %1703 = vmatprep.subr.bf16.mxu0 0
    %1704 = vmatpush1.bf16.msra.mxu0 %v1489
    %1705 = vmatprep.subr.bf16.mxu0 0
    %1706 = vmatpush1.bf16.msra.mxu0 %v1492
    %1707 = vmatprep.subr.bf16.mxu0 0
    %1708 = vmatpush1.bf16.msra.mxu0 %v1495
    %1709 = vmatprep.subr.bf16.mxu0 0
    %1710 = vmatpush1.bf16.msra.mxu0 %v1498
    %1711 = vmatprep.subr.bf16.mxu0 0
    %1712 = vmatpush1.bf16.msra.mxu0 %v1501
    %1713 = vmatprep.subr.bf16.mxu0 0
    %1714 = vmatpush1.bf16.msra.mxu0 %v1504
    %1715 = vmatprep.mubr.bf16.mxu0 %v1119
    %1716 = vmatmul.mubr.bf16.gmra.mrb[0].mxu0 %v1118
    %v1717 = vpop.f32.mrb[0].mxu0
    %v1718 = vadd.f32 0.0, %v1717
    %v1719 = vpop.f32.mrb[0].mxu0
    %v1720 = vpop.f32.mrb[0].mxu0
    %v1721 = vpop.f32.mrb[0].mxu0
    %1722 = vdwg.mxu0
    %1723 = vmatprep.subr.bf16.mxu0 0
    %1724 = vmatpush1.bf16.msra.mxu0 %v1507
    %1725 = vmatprep.subr.bf16.mxu0 0
    %1726 = vmatpush1.bf16.msra.mxu0 %v1510
    %1727 = vmatprep.subr.bf16.mxu0 0
    %1728 = vmatpush1.bf16.msra.mxu0 %v1513
    %1729 = vmatprep.subr.bf16.mxu0 0
    %1730 = vmatpush1.bf16.msra.mxu0 %v1516
    %1731 = vmatprep.subr.bf16.mxu0 0
    %1732 = vmatpush1.bf16.msra.mxu0 %v1519
    %1733 = vmatprep.subr.bf16.mxu0 0
    %1734 = vmatpush1.bf16.msra.mxu0 %v1522
    %1735 = vmatprep.subr.bf16.mxu0 0
    %1736 = vmatpush1.bf16.msra.mxu0 %v1525
    %1737 = vmatprep.subr.bf16.mxu0 0
    %1738 = vmatpush1.bf16.msra.mxu0 %v1528
    %1739 = vmatprep.subr.bf16.mxu0 0
    %1740 = vmatpush1.bf16.msra.mxu0 0
    %1741 = vmatprep.subr.bf16.mxu0 0
    %1742 = vmatpush1.bf16.msra.mxu0 0
    %1743 = vmatprep.subr.bf16.mxu0 0
    %1744 = vmatpush1.bf16.msra.mxu0 0
    %1745 = vmatprep.subr.bf16.mxu0 0
    %1746 = vmatpush1.bf16.msra.mxu0 0
    %1747 = vmatprep.subr.bf16.mxu0 0
    %1748 = vmatpush1.bf16.msra.mxu0 0
    %1749 = vmatprep.subr.bf16.mxu0 0
    %1750 = vmatpush1.bf16.msra.mxu0 0
    %1751 = vmatprep.subr.bf16.mxu0 0
    %1752 = vmatpush1.bf16.msra.mxu0 0
    %1753 = vmatprep.subr.bf16.mxu0 0
    %1754 = vmatpush1.bf16.msra.mxu0 0
    %1755 = vmatprep.mubr.bf16.mxu0 0
    %1756 = vmatmul.mubr.bf16.gmra.mrb[0].mxu0 %v1120
    %v1757 = vpop.f32.mrb[0].mxu0
    %v1758 = vadd.f32 %v1718, %v1757
    %v1759 = vpop.f32.mrb[0].mxu0
    %v1760 = vpop.f32.mrb[0].mxu0
    %v1761 = vpop.f32.mrb[0].mxu0
    %1762 = vdwg.mxu0
    %v1763 = vrot.slane %v1677, 4
    %v1764 = vadd.f32 %v1677, %v1763
    %v1765 = vrot.slane %v1764, 2
    %v1766 = vadd.f32 %v1764, %v1765
    %v1767 = vrot.slane %v1766, 1
    %v1768 = vadd.f32 %v1766, %v1767
    %v1769 = vrot.slane %v1679, 4
    %v1770 = vadd.f32 %v1679, %v1769
    %v1771 = vrot.slane %v1770, 2
    %v1772 = vadd.f32 %v1770, %v1771
    %v1773 = vrot.slane %v1772, 1
    %v1774 = vadd.f32 %v1772, %v1773
    %v1775 = vrot.slane %v1758, 4
    %v1776 = vadd.f32 %v1758, %v1775
    %v1777 = vrot.slane %v1776, 2
    %v1778 = vadd.f32 %v1776, %v1777
    %v1779 = vrot.slane %v1778, 1
    %v1780 = vadd.f32 %v1778, %v1779
    %v1781 = vmul.f32 %v1677, %v1677
    %v1782 = vmul.f32 %v1679, %v1679
    %v1783 = vmul.f32 %v1758, %v1758
    %v1784 = vrot.slane %v1781, 4
    %v1785 = vadd.f32 %v1781, %v1784
    %v1786 = vrot.slane %v1785, 2
    %v1787 = vadd.f32 %v1785, %v1786
    %v1788 = vrot.slane %v1787, 1
    %v1789 = vadd.f32 %v1787, %v1788
    %v1790 = vrot.slane %v1782, 4
    %v1791 = vadd.f32 %v1782, %v1790
    %v1792 = vrot.slane %v1791, 2
    %v1793 = vadd.f32 %v1791, %v1792
    %v1794 = vrot.slane %v1793, 1
    %v1795 = vadd.f32 %v1793, %v1794
    %v1796 = vrot.slane %v1783, 4
    %v1797 = vadd.f32 %v1783, %v1796
    %v1798 = vrot.slane %v1797, 2
    %v1799 = vadd.f32 %v1797, %v1798
    %v1800 = vrot.slane %v1799, 1
    %v1801 = vadd.f32 %v1799, %v1800
    %v1802 = vmul.f32 %v1768, 0.125
    %v1803 = vmul.f32 %v1774, 0.125
    %v1804 = vmul.f32 %v1780, 0.125
    %v1805 = vmul.f32 %v1789, 0.125
    %v1806 = vmul.f32 %v1795, 0.125
    %v1807 = vmul.f32 %v1801, 0.125
    %v1808 = vmul.f32 %v1802, %v1802
    %v1809 = vmul.f32 %v1803, %v1803
    %v1810 = vmul.f32 %v1804, %v1804
    %v1811 = vsub.f32 %v1805, %v1808
    %v1812 = vsub.f32 %v1806, %v1809
    %v1813 = vsub.f32 %v1807, %v1810
    %v1814 = vsub.f32 %v1677, %v1802
    %v1815 = vsub.f32 %v1679, %v1803
    %v1816 = vsub.f32 %v1758, %v1804
    %v1817 = vadd.f32 %v1811, 1e-05
    %v1818 = vadd.f32 %v1812, 1e-05
    %v1819 = vadd.f32 %v1813, 1e-05
    %v1820 = vrsqrt.pop %v1817
    %v1821 = vrsqrt.pop %v1818
    %v1822 = vrsqrt.pop %v1819
    %v1823 = vmul.f32 %v1814, %v1820
    %v1824 = vmul.f32 %v1815, %v1821
    %v1825 = vmul.f32 %v1816, %v1822
    %v1827 = vlaneseq
    %v1828 = vshrl.u32 %v1827, 7
    %v1829 = vsub.s32 0, %v1828
    %v1830 = vrot.slane %v107, %v1829
    %v1831 = vlaneseq
    %v1832 = vshrl.u32 %v1831, 7
    %v1833 = vsub.s32 1, %v1832
    %v1834 = vrot.slane %v107, %v1833
    %v1835 = vlaneseq
    %v1836 = vshrl.u32 %v1835, 7
    %v1837 = vsub.s32 2, %v1836
    %v1838 = vrot.slane %v107, %v1837
    %v1842 = vmul.f32 %v1823, %v1830
    %v1843 = vmul.f32 %v1824, %v1834
    %v1844 = vmul.f32 %v1825, %v1838
    %v1846 = vlaneseq
    %v1847 = vshrl.u32 %v1846, 7
    %v1848 = vsub.s32 0, %v1847
    %v1849 = vrot.slane %v113, %v1848
    %v1850 = vlaneseq
    %v1851 = vshrl.u32 %v1850, 7
    %v1852 = vsub.s32 1, %v1851
    %v1853 = vrot.slane %v113, %v1852
    %v1854 = vlaneseq
    %v1855 = vshrl.u32 %v1854, 7
    %v1856 = vsub.s32 2, %v1855
    %v1857 = vrot.slane %v113, %v1856
    %v1861 = vadd.f32 %v1842, %v1849
    %v1862 = vadd.f32 %v1843, %v1853
    %v1863 = vadd.f32 %v1844, %v1857
    %v1864 = vmax.f32 %v1861, 0.0
    %v1865 = vmax.f32 %v1862, 0.0
    %v1866 = vmax.f32 %v1863, 0.0
    %v1867 = vpack.c.bf16 %v1864, %v1864
    %v1868 = vpack.c.bf16 %v1865, %v1865
    %v1869 = vpack.c.bf16 %v1866, %v1866
    %v1870 = vld [vmem:[#allocation10] sm:$0xf]
    %v1871 = vld [vmem:[#allocation10 + $0x4] sm:$0xf]
    %v1872 = vld [vmem:[#allocation10 + $0x8] sm:$0xf]
    %v1873 = vld [vmem:[#allocation10 + $0xc] sm:$0xf]
    %v1874 = vld [vmem:[#allocation10 + $0x10] sm:$0xf]
    %v1875 = vld [vmem:[#allocation10 + $0x14] sm:$0xf]
    %v1876 = vld [vmem:[#allocation10 + $0x18] sm:$0xf]
    %v1877 = vld [vmem:[#allocation10 + $0x1c] sm:$0xf]
    %v1878 = vld [vmem:[#allocation10 + $0x20] sm:$0xf]
    %v1879 = vld [vmem:[#allocation10 + $0x24] sm:$0xf]
    %v1880 = vld [vmem:[#allocation10 + $0x28] sm:$0xf]
    %v1881 = vld [vmem:[#allocation10 + $0x2c] sm:$0xf]
    %v1882 = vld [vmem:[#allocation10 + $0x30] sm:$0xf]
    %v1883 = vld [vmem:[#allocation10 + $0x34] sm:$0xf]
    %v1884 = vld [vmem:[#allocation10 + $0x38] sm:$0xf]
    %v1885 = vld [vmem:[#allocation10 + $0x3c] sm:$0xf]
    %v1886 = vld [vmem:[#allocation10 + $0x40] sm:$0xf]
    %v1887 = vld [vmem:[#allocation10 + $0x44] sm:$0xf]
    %v1888 = vld [vmem:[#allocation10 + $0x48] sm:$0xf]
    %v1889 = vld [vmem:[#allocation10 + $0x4c] sm:$0xf]
    %v1890 = vld [vmem:[#allocation10 + $0x50] sm:$0xf]
    %v1891 = vld [vmem:[#allocation10 + $0x54] sm:$0xf]
    %v1892 = vld [vmem:[#allocation10 + $0x58] sm:$0xf]
    %v1893 = vld [vmem:[#allocation10 + $0x5c] sm:$0xf]
    %v1894 = vld [vmem:[#allocation10 + $0x60] sm:$0xf]
    %v1895 = vld [vmem:[#allocation10 + $0x64] sm:$0xf]
    %v1896 = vld [vmem:[#allocation10 + $0x68] sm:$0xf]
    %v1897 = vld [vmem:[#allocation10 + $0x6c] sm:$0xf]
    %v1898 = vld [vmem:[#allocation10 + $0x70] sm:$0xf]
    %v1899 = vld [vmem:[#allocation10 + $0x74] sm:$0xf]
    %v1900 = vld [vmem:[#allocation10 + $0x78] sm:$0xf]
    %v1901 = vld [vmem:[#allocation10 + $0x7c] sm:$0xf]
    %v1902 = vld [vmem:[#allocation10 + $0x80] sm:$0xf]
    %v1903 = vld [vmem:[#allocation10 + $0x84] sm:$0xf]
    %v1904 = vld [vmem:[#allocation10 + $0x88] sm:$0xf]
    %v1905 = vld [vmem:[#allocation10 + $0x8c] sm:$0xf]
    %v1906 = vld [vmem:[#allocation10 + $0x90] sm:$0xf]
    %v1907 = vld [vmem:[#allocation10 + $0x94] sm:$0xf]
    %v1908 = vld [vmem:[#allocation10 + $0x98] sm:$0xf]
    %v1909 = vld [vmem:[#allocation10 + $0x9c] sm:$0xf]
    %v1910 = vld [vmem:[#allocation10 + $0xa0] sm:$0xf]
    %v1911 = vld [vmem:[#allocation10 + $0xa4] sm:$0xf]
    %v1912 = vld [vmem:[#allocation10 + $0xa8] sm:$0xf]
    %v1913 = vld [vmem:[#allocation10 + $0xac] sm:$0xf]
    %v1914 = vld [vmem:[#allocation10 + $0xb0] sm:$0xf]
    %v1915 = vld [vmem:[#allocation10 + $0xb4] sm:$0xf]
    %v1916 = vld [vmem:[#allocation10 + $0xb8] sm:$0xf]
    %v1917 = vld [vmem:[#allocation10 + $0xbc] sm:$0xf]
    %v1966 = vunpack.c.l.b16 %v1870
    %v1967 = vunpack.c.l.b16 %v1871
    %v1968 = vunpack.c.l.b16 %v1872
    %v1969 = vunpack.c.l.b16 %v1873
    %v1970 = vunpack.c.l.b16 %v1874
    %v1971 = vunpack.c.l.b16 %v1875
    %v1972 = vunpack.c.l.b16 %v1876
    %v1973 = vunpack.c.l.b16 %v1877
    %v1974 = vunpack.c.l.b16 %v1878
    %v1975 = vunpack.c.l.b16 %v1879
    %v1976 = vunpack.c.l.b16 %v1880
    %v1977 = vunpack.c.l.b16 %v1881
    %v1978 = vunpack.c.l.b16 %v1882
    %v1979 = vunpack.c.l.b16 %v1883
    %v1980 = vunpack.c.l.b16 %v1884
    %v1981 = vunpack.c.l.b16 %v1885
    %v1982 = vunpack.c.l.b16 %v1886
    %v1983 = vunpack.c.l.b16 %v1887
    %v1984 = vunpack.c.l.b16 %v1888
    %v1985 = vunpack.c.l.b16 %v1889
    %v1986 = vunpack.c.l.b16 %v1890
    %v1987 = vunpack.c.l.b16 %v1891
    %v1988 = vunpack.c.l.b16 %v1892
    %v1989 = vunpack.c.l.b16 %v1893
    %v1990 = vunpack.c.l.b16 %v1894
    %v1991 = vunpack.c.l.b16 %v1895
    %v1992 = vunpack.c.l.b16 %v1896
    %v1993 = vunpack.c.l.b16 %v1897
    %v1994 = vunpack.c.l.b16 %v1898
    %v1995 = vunpack.c.l.b16 %v1899
    %v1996 = vunpack.c.l.b16 %v1900
    %v1997 = vunpack.c.l.b16 %v1901
    %v1998 = vunpack.c.l.b16 %v1902
    %v1999 = vunpack.c.l.b16 %v1903
    %v2000 = vunpack.c.l.b16 %v1904
    %v2001 = vunpack.c.l.b16 %v1905
    %v2002 = vunpack.c.l.b16 %v1906
    %v2003 = vunpack.c.l.b16 %v1907
    %v2004 = vunpack.c.l.b16 %v1908
    %v2005 = vunpack.c.l.b16 %v1909
    %v2006 = vunpack.c.l.b16 %v1910
    %v2007 = vunpack.c.l.b16 %v1911
    %v2008 = vunpack.c.l.b16 %v1912
    %v2009 = vunpack.c.l.b16 %v1913
    %v2010 = vunpack.c.l.b16 %v1914
    %v2011 = vunpack.c.l.b16 %v1915
    %v2012 = vunpack.c.l.b16 %v1916
    %v2013 = vunpack.c.l.b16 %v1917
    %v2014 = vpack.c.b16 %v1967, %v1966
    %v2015 = vpack.c.b16 %v1969, %v1968
    %v2016 = vpack.c.b16 %v1971, %v1970
    %v2017 = vpack.c.b16 %v1973, %v1972
    %v2018 = vpack.c.b16 %v1975, %v1974
    %v2019 = vpack.c.b16 %v1977, %v1976
    %v2020 = vpack.c.b16 %v1979, %v1978
    %v2021 = vpack.c.b16 %v1981, %v1980
    %v2022 = vpack.c.b16 %v1983, %v1982
    %v2023 = vpack.c.b16 %v1985, %v1984
    %v2024 = vpack.c.b16 %v1987, %v1986
    %v2025 = vpack.c.b16 %v1989, %v1988
    %v2026 = vpack.c.b16 %v1991, %v1990
    %v2027 = vpack.c.b16 %v1993, %v1992
    %v2028 = vpack.c.b16 %v1995, %v1994
    %v2029 = vpack.c.b16 %v1997, %v1996
    %v2030 = vpack.c.b16 %v1999, %v1998
    %v2031 = vpack.c.b16 %v2001, %v2000
    %v2032 = vpack.c.b16 %v2003, %v2002
    %v2033 = vpack.c.b16 %v2005, %v2004
    %v2034 = vpack.c.b16 %v2007, %v2006
    %v2035 = vpack.c.b16 %v2009, %v2008
    %v2036 = vpack.c.b16 %v2011, %v2010
    %v2037 = vpack.c.b16 %v2013, %v2012
    %2062 = vmatprep.subr.bf16.mxu0 0
    %2063 = vmatpush1.bf16.msra.mxu0 %v2014
    %2064 = vmatprep.subr.bf16.mxu0 0
    %2065 = vmatpush1.bf16.msra.mxu0 %v2015
    %2066 = vmatprep.subr.bf16.mxu0 0
    %2067 = vmatpush1.bf16.msra.mxu0 %v2016
    %2068 = vmatprep.subr.bf16.mxu0 0
    %2069 = vmatpush1.bf16.msra.mxu0 %v2017
    %2070 = vmatprep.subr.bf16.mxu0 0
    %2071 = vmatpush1.bf16.msra.mxu0 %v2018
    %2072 = vmatprep.subr.bf16.mxu0 0
    %2073 = vmatpush1.bf16.msra.mxu0 %v2019
    %2074 = vmatprep.subr.bf16.mxu0 0
    %2075 = vmatpush1.bf16.msra.mxu0 %v2020
    %2076 = vmatprep.subr.bf16.mxu0 0
    %2077 = vmatpush1.bf16.msra.mxu0 %v2021
    %2078 = vmatprep.subr.bf16.mxu0 0
    %2079 = vmatpush1.bf16.msra.mxu0 %v2022
    %2080 = vmatprep.subr.bf16.mxu0 0
    %2081 = vmatpush1.bf16.msra.mxu0 %v2023
    %2082 = vmatprep.subr.bf16.mxu0 0
    %2083 = vmatpush1.bf16.msra.mxu0 %v2024
    %2084 = vmatprep.subr.bf16.mxu0 0
    %2085 = vmatpush1.bf16.msra.mxu0 %v2025
    %2086 = vmatprep.subr.bf16.mxu0 0
    %2087 = vmatpush1.bf16.msra.mxu0 %v2026
    %2088 = vmatprep.subr.bf16.mxu0 0
    %2089 = vmatpush1.bf16.msra.mxu0 %v2027
    %2090 = vmatprep.subr.bf16.mxu0 0
    %2091 = vmatpush1.bf16.msra.mxu0 %v2028
    %2092 = vmatprep.subr.bf16.mxu0 0
    %2093 = vmatpush1.bf16.msra.mxu0 %v2029
    %2094 = vmatprep.mubr.bf16.mxu0 %v1868
    %2095 = vmatmul.mubr.bf16.gmra.mrb[0].mxu0 %v1867
    %v2096 = vpop.f32.mrb[0].mxu0
    %v2097 = vadd.f32 %v114, %v2096
    %v2098 = vpop.f32.mrb[0].mxu0
    %v2099 = vpop.f32.mrb[0].mxu0
    %v2100 = vpop.f32.mrb[0].mxu0
    %2101 = vdwg.mxu0
    %2102 = vmatprep.subr.bf16.mxu0 0
    %2103 = vmatpush1.bf16.msra.mxu0 %v2030
    %2104 = vmatprep.subr.bf16.mxu0 0
    %2105 = vmatpush1.bf16.msra.mxu0 %v2031
    %2106 = vmatprep.subr.bf16.mxu0 0
    %2107 = vmatpush1.bf16.msra.mxu0 %v2032
    %2108 = vmatprep.subr.bf16.mxu0 0
    %2109 = vmatpush1.bf16.msra.mxu0 %v2033
    %2110 = vmatprep.subr.bf16.mxu0 0
    %2111 = vmatpush1.bf16.msra.mxu0 %v2034
    %2112 = vmatprep.subr.bf16.mxu0 0
    %2113 = vmatpush1.bf16.msra.mxu0 %v2035
    %2114 = vmatprep.subr.bf16.mxu0 0
    %2115 = vmatpush1.bf16.msra.mxu0 %v2036
    %2116 = vmatprep.subr.bf16.mxu0 0
    %2117 = vmatpush1.bf16.msra.mxu0 %v2037
    %2118 = vmatprep.subr.bf16.mxu0 0
    %2119 = vmatpush1.bf16.msra.mxu0 0
    %2120 = vmatprep.subr.bf16.mxu0 0
    %2121 = vmatpush1.bf16.msra.mxu0 0
    %2122 = vmatprep.subr.bf16.mxu0 0
    %2123 = vmatpush1.bf16.msra.mxu0 0
    %2124 = vmatprep.subr.bf16.mxu0 0
    %2125 = vmatpush1.bf16.msra.mxu0 0
    %2126 = vmatprep.subr.bf16.mxu0 0
    %2127 = vmatpush1.bf16.msra.mxu0 0
    %2128 = vmatprep.subr.bf16.mxu0 0
    %2129 = vmatpush1.bf16.msra.mxu0 0
    %2130 = vmatprep.subr.bf16.mxu0 0
    %2131 = vmatpush1.bf16.msra.mxu0 0
    %2132 = vmatprep.subr.bf16.mxu0 0
    %2133 = vmatpush1.bf16.msra.mxu0 0
    %2134 = vmatprep.mubr.bf16.mxu0 0
    %2135 = vmatmul.mubr.bf16.gmra.mrb[0].mxu0 %v1869
    %v2136 = vpop.f32.mrb[0].mxu0
    %v2137 = vadd.f32 %v2097, %v2136
    %v2138 = vpop.f32.mrb[0].mxu0
    %v2139 = vpop.f32.mrb[0].mxu0
    %v2140 = vpop.f32.mrb[0].mxu0
    %2141 = vdwg.mxu0
    %2142 = vst [vmem:[#allocation13] sm:$0xff] %v2137
    // Predicated region
    $region50: #{tpu_custom_call.1} parent=1 // pred_check
      _
    $region51: #{tpu_custom_call.1} parent=1 // pred_check_branch
      %2144 = sbr.rel (0) target = $region53
    $region52: #{tpu_custom_call.1} parent=1 // pred_region
      %s2146 = ssub.s32 128, 128
      %2147 = vsyncadd [#allocation4], %s2146
      %s2149 = sshll.u32 [#allocation13], 4
      %s2150 = int_to_ptr.vmem [resolvable:$true] %s2149
      %2152 = dma.vmem_to_hbm [thread:$0]  %s2150, 128, %s6, [#allocation4]
    $region53: #{tpu_custom_call.1} parent=1 // pred_fallthru
      _
    // Predicated region
    $region54: #{tpu_custom_call.1} parent=1 // pred_check
      _
    $region55: #{tpu_custom_call.1} parent=1 // pred_check_branch
      %2154 = sbr.rel (0) target = $region57
    $region56: #{tpu_custom_call.1} parent=1 // pred_region
      %2155 = dma.done [#allocation4], 128
    $region57: #{tpu_custom_call.1} parent=1 // pred_fallthru
      _
    %2156 = vsyncpa [#allocation3], 1
    %2157 = vsyncpa [#allocation6], 1
    %2158 = vsyncpa [#allocation9], 1
    %2159 = vsyncpa [#allocation12], 1
    %2160 = vsyncpa [#allocation4], 1

</llo_original>
